<compile_context>
chip_gen: v5e
topology: v5e:2x2
jax: 0.10.0
libtpu: 0.0.40
codegen_flags: <defaults>
</compile_context>

<pallas_src>
import functools

import jax
import jax.numpy as jnp
from jax import lax
from jax.experimental import pallas as pl
from jax.experimental.pallas import tpu as pltpu

EPS = 1e-5
NEG_SLOPE = 0.2

# Static architecture config (Python ints only — never traced under jit).
ENCODER_CONFIG = (
    dict(stride=2, pad=1, groups=4),
    dict(stride=2, pad=1, groups=4),
)


# ----------------------------------------------------------------------------
# Pallas kernels
# ----------------------------------------------------------------------------
def _conv_gn_lrelu(p_ref, w_ref, g_ref, b_ref, pavg_ref):
    """conv (im2col matmul on MXU) + GroupNorm + LeakyReLU for the whole batch.

    p_ref   : (B, M, Kd)  bf16 im2col patches (M = Hout*Wout)
    w_ref   : (Kd, C)     bf16 conv weight (flattened HWIO)
    g_ref   : (1, C)      f32 GroupNorm gamma
    b_ref   : (1, C)      f32 GroupNorm beta
    pavg_ref: (C, C)      f32 group-averaging matrix: 1/(M*C//G) within a group
    returns : (B, M, C)   f32 activation
    """
    B, M, Kd = p_ref.shape
    C = w_ref.shape[1]

    # Single big MXU matmul over all B*M rows (bf16 inputs, f32 accumulation).
    y = jnp.dot(
        p_ref[...].reshape(B * M, Kd), w_ref[...],
        preferred_element_type=jnp.float32,
    ).reshape(B, M, C)

    # Per-sample, per-group stats. Centered variance (robust to cancellation);
    # group averaging is one tiny (B,C)@(C,C) matmul each for mean and var.
    mean = jnp.dot(jnp.sum(y, axis=1), pavg_ref[...],
                   preferred_element_type=jnp.float32,
                   precision=lax.Precision.HIGHEST)          # (B, C)
    d = y - mean[:, None, :]                                 # (B, M, C)
    var = jnp.dot(jnp.sum(d * d, axis=1), pavg_ref[...],
                  preferred_element_type=jnp.float32,
                  precision=lax.Precision.HIGHEST)           # (B, C)

    # Fold GN affine: rsqrt only on (B, C); normalize+affine is one FMA pass.
    scale = g_ref[...] * lax.rsqrt(var + EPS)                # (B, C)
    yn = d * scale[:, None, :] + b_ref[...]                  # (B, M, C)
    return jnp.where(yn >= 0, yn, NEG_SLOPE * yn)            # LeakyReLU(0.2)


def conv_block_kernel(p_ref, w_ref, g_ref, b_ref, pavg_ref, o_ref):
    """Intermediate block: conv + GroupNorm + LeakyReLU."""
    a = _conv_gn_lrelu(p_ref, w_ref, g_ref, b_ref, pavg_ref)
    o_ref[...] = a.astype(o_ref.dtype)


def final_block_kernel(p_ref, w_ref, g_ref, b_ref, pavg_ref, wl_ref,
                       skip_ref, out_ref):
    """Deepest block fused with last_conv: conv+GN+LeakyReLU, then the
    full-spatial VALID conv (== contraction over (m, c)) + tanh.

    wl_ref  : (M, C, nh) bf16 last_conv weight (HWIO with H*W == M)
    skip_ref: (B, M, C)  f32 skip-connection output of this block
    out_ref : (B, nh)    f32 flattened latent
    """
    a = _conv_gn_lrelu(p_ref, w_ref, g_ref, b_ref, pavg_ref)   # (B, M, C) f32
    skip_ref[...] = a.astype(skip_ref.dtype)

    B, M, C = a.shape
    nh = wl_ref.shape[2]
    a_bf = a.astype(jnp.bfloat16)
    wl = wl_ref[...]                                           # (M, C, nh)

    # Statically-unrolled sum of per-spatial-position MXU dots; avoids any
    # in-kernel (B, M, C) -> (B, M*C) relayout.  M is tiny (e.g. 16).
    acc = jnp.zeros((B, nh), jnp.float32)
    for m in range(M):
        acc = acc + jnp.dot(a_bf[:, m, :], wl[m],
                            preferred_element_type=jnp.float32)
    out_ref[...] = jnp.tanh(acc).astype(out_ref.dtype)


# ----------------------------------------------------------------------------
# Glue: im2col + pallas_call wrappers
# ----------------------------------------------------------------------------
def im2col(x_nhwc, K, stride, pad):
    """Static-shape im2col. K/stride/pad are Python ints (never traced)."""
    B, H, W, C = x_nhwc.shape
    xp = jnp.pad(x_nhwc, ((0, 0), (pad, pad), (pad, pad), (0, 0)))
    Hp, Wp = H + 2 * pad, W + 2 * pad
    Ho = (Hp - K) // stride + 1
    Wo = (Wp - K) // stride + 1
    cols = []
    for ki in range(K):
        for kj in range(K):
            cols.append(
                xp[:, ki:ki + stride * Ho:stride, kj:kj + stride * Wo:stride, :]
            )  # (B, Ho, Wo, C)
    patches = jnp.stack(cols, axis=3)                       # (B, Ho, Wo, K*K, C)
    patches = patches.reshape(B, Ho * Wo, K * K * C)        # (kh, kw, cin) order
    return patches, Ho, Wo


def _group_avg_matrix(C, groups, M):
    cg = C // groups
    onehot = (jnp.arange(C)[:, None] // cg
              == jnp.arange(groups)[None, :]).astype(jnp.float32)      # (C, G)
    return (onehot @ onehot.T) / jnp.float32(M * cg)                    # (C, C)


def conv_block(h_nhwc, w_hwio, gamma, beta, stride, pad, groups):
    K, _, Cin, Cout = w_hwio.shape
    patches, Ho, Wo = im2col(h_nhwc, K, stride, pad)        # (B, M, Kd) f32
    B, M, Kd = patches.shape
    w2d = w_hwio.reshape(K * K * Cin, Cout)
    pavg = _group_avg_matrix(Cout, groups, M)

    out = pl.pallas_call(
        conv_block_kernel,
        out_shape=jax.ShapeDtypeStruct((B, M, Cout), jnp.float32),
        grid_spec=pltpu.PrefetchScalarGridSpec(
            num_scalar_prefetch=0,
            grid=(1,),
            in_specs=[
                pl.BlockSpec((B, M, Kd), lambda i: (0, 0, 0)),
                pl.BlockSpec((Kd, Cout), lambda i: (0, 0)),
                pl.BlockSpec((1, Cout), lambda i: (0, 0)),
                pl.BlockSpec((1, Cout), lambda i: (0, 0)),
                pl.BlockSpec((Cout, Cout), lambda i: (0, 0)),
            ],
            out_specs=pl.BlockSpec((B, M, Cout), lambda i: (0, 0, 0)),
        ),
        compiler_params=pltpu.CompilerParams(dimension_semantics=("arbitrary",)),
    )(patches.astype(jnp.bfloat16), w2d.astype(jnp.bfloat16),
      gamma.reshape(1, Cout), beta.reshape(1, Cout), pavg)
    return out.reshape(B, Ho, Wo, Cout)


def final_block(h_nhwc, w_hwio, gamma, beta, w_last_hwio, stride, pad, groups):
    """Deepest conv block fused with last_conv + tanh (single pallas_call)."""
    K, _, Cin, Cout = w_hwio.shape
    patches, Ho, Wo = im2col(h_nhwc, K, stride, pad)        # (B, M, Kd) f32
    B, M, Kd = patches.shape
    w2d = w_hwio.reshape(K * K * Cin, Cout)
    pavg = _group_avg_matrix(Cout, groups, M)

    Kl, Kl2, Cl, nh = w_last_hwio.shape
    # SRVP last_conv is a full-spatial VALID conv: kernel == final feature map.
    assert (Kl, Kl2, Cl) == (Ho, Wo, Cout), (Kl, Kl2, Cl, Ho, Wo, Cout)
    wl3 = w_last_hwio.reshape(Kl * Kl2, Cl, nh)             # (M, C, nh), HWIO order

    skip, out = pl.pallas_call(
        final_block_kernel,
        out_shape=(jax.ShapeDtypeStruct((B, M, Cout), jnp.float32),
                   jax.ShapeDtypeStruct((B, nh), jnp.float32)),
        grid_spec=pltpu.PrefetchScalarGridSpec(
            num_scalar_prefetch=0,
            grid=(1,),
            in_specs=[
                pl.BlockSpec((B, M, Kd), lambda i: (0, 0, 0)),
                pl.BlockSpec((Kd, Cout), lambda i: (0, 0)),
                pl.BlockSpec((1, Cout), lambda i: (0, 0)),
                pl.BlockSpec((1, Cout), lambda i: (0, 0)),
                pl.BlockSpec((Cout, Cout), lambda i: (0, 0)),
                pl.BlockSpec((M, Cout, nh), lambda i: (0, 0, 0)),
            ],
            out_specs=(
                pl.BlockSpec((B, M, Cout), lambda i: (0, 0, 0)),
                pl.BlockSpec((B, nh), lambda i: (0, 0)),
            ),
        ),
        compiler_params=pltpu.CompilerParams(dimension_semantics=("arbitrary",)),
    )(patches.astype(jnp.bfloat16), w2d.astype(jnp.bfloat16),
      gamma.reshape(1, Cout), beta.reshape(1, Cout), pavg,
      wl3.astype(jnp.bfloat16))
    return skip.reshape(B, Ho, Wo, Cout), out


def base_encoder_forward(x_nchw, params, config, return_skip=False):
    """Mirrors BaseEncoder.forward: loop conv blocks, collect skips, last_conv, flatten."""
    h = jnp.transpose(x_nchw, (0, 2, 3, 1))  # NCHW -> NHWC
    skips = []
    n_blocks = len(config)
    out = None
    for idx, (blk, cfg) in enumerate(zip(params["conv"], config)):
        if idx < n_blocks - 1:
            h = conv_block(h, blk["w"], blk["gamma"], blk["beta"],
                           cfg["stride"], cfg["pad"], cfg["groups"])
            skips.append(h)
        else:
            skip, out = final_block(h, blk["w"], blk["gamma"], blk["beta"],
                                    params["last_w"],
                                    cfg["stride"], cfg["pad"], cfg["groups"])
            skips.append(skip)
    if return_skip:
        # skips deepest-first, converted back to NCHW to match PyTorch
        return out, [jnp.transpose(s, (0, 3, 1, 2)) for s in skips[::-1]]
    return out


# ----------------------------------------------------------------------------
# Pure-JAX reference (for verification)
# ----------------------------------------------------------------------------
def _group_norm_ref(h, gamma, beta, G, eps=EPS):
    B, H, W, C = h.shape
    hg = h.reshape(B, H * W, G, C // G)
    mean = hg.mean(axis=(1, 3), keepdims=True)
    var = ((hg - mean) ** 2).mean(axis=(1, 3), keepdims=True)
    hn = ((hg - mean) * lax.rsqrt(var + eps)).reshape(B, H, W, C)
    return hn * gamma + beta


def ref_forward(x_nchw, params, config):
    h = jnp.transpose(x_nchw, (0, 2, 3, 1))
    dn = ("NHWC", "HWIO", "NHWC")
    for blk, cfg in zip(params["conv"], config):
        s, p = cfg["stride"], cfg["pad"]
        h = lax.conv_general_dilated(h, blk["w"], (s, s), [(p, p), (p, p)],
                                     dimension_numbers=dn)
        h = _group_norm_ref(h, blk["gamma"], blk["beta"], cfg["groups"])
        h = jnp.where(h >= 0, h, NEG_SLOPE * h)
    h = lax.conv_general_dilated(h, params["last_w"], (1, 1), "VALID",
                                 dimension_numbers=dn)
    return jnp.tanh(h).reshape(-1, params["last_w"].shape[-1])


# ----------------------------------------------------------------------------
# Deterministic parameter init + demo
# ----------------------------------------------------------------------------
def make_params(key, cin=4, nf=32, nh=32):
    k1, k2, k3, k4, k5 = jax.random.split(key, 5)

    def conv_w(k, K, ci, co):
        scale = 1.0 / jnp.sqrt(K * K * ci)
        return scale * jax.random.normal(k, (K, K, ci, co), jnp.float32)

    params = {
        "conv": [
            dict(w=conv_w(k1, 4, cin, nf),
                 gamma=1.0 + 0.1 * jax.random.normal(k4, (nf,), jnp.float32),
                 beta=0.1 * jax.random.normal(k5, (nf,), jnp.float32)),
            dict(w=conv_w(k2, 4, nf, 2 * nf),
                 gamma=jnp.ones((2 * nf,), jnp.float32),
                 beta=jnp.zeros((2 * nf,), jnp.float32)),
        ],
        "last_w": conv_w(k3, 4, 2 * nf, nh),   # 4x4 conv over the remaining 4x4 map
    }
    return params


if __name__ == "__main__":
    key = jax.random.PRNGKey(0)
    kx, kp = jax.random.split(key)

    B, C, HW = 2, 4, 16
    nh = 32
    x = jax.random.normal(kx, (B, C, HW, HW), jnp.float32)   # NCHW, as in PyTorch
    params = make_params(kp, cin=C, nf=32, nh=nh)

    # config is bound via functools.partial -> Python ints stay concrete under jit.
    fwd = jax.jit(functools.partial(base_encoder_forward,
                                    config=ENCODER_CONFIG, return_skip=False))
    out = jax.block_until_ready(fwd(x, params))
    assert out.shape == (B, nh), out.shape

    # Verify against a pure-JAX reference (loose tol: bf16 MXU operands).
    ref = jax.block_until_ready(ref_forward(x, params, ENCODER_CONFIG))
    assert jnp.allclose(out, ref, atol=5e-2, rtol=5e-2), \
        float(jnp.max(jnp.abs(out - ref)))

    # Skip-connection path: deepest-first, NCHW, latent unchanged.
    fwd_skip = jax.jit(functools.partial(base_encoder_forward,
                                         config=ENCODER_CONFIG, return_skip=True))
    res = jax.block_until_ready(fwd_skip(x, params))
    out2, skips = res
    assert out2.shape == (B, nh)
    assert [tuple(s.shape) for s in skips] == [(B, 64, 4, 4), (B, 32, 8, 8)], \
        [s.shape for s in skips]
    assert jnp.allclose(out2, out, atol=1e-5, rtol=1e-5)

    print("KERNEL_OK")
</pallas_src>

<mosaic_0001>
module attributes {stable_mosaic.version = 11 : i64} {
  func.func @conv_block_kernel(%arg0: i32, %arg1: memref<2x64x64xbf16, #tpu.memory_space<vmem>>, %arg2: memref<64x32xbf16, #tpu.memory_space<vmem>>, %arg3: memref<1x32xf32, #tpu.memory_space<vmem>>, %arg4: memref<1x32xf32, #tpu.memory_space<vmem>>, %arg5: memref<32x32xf32, #tpu.memory_space<vmem>>, %arg6: memref<2x64x32xf32, #tpu.memory_space<vmem>>) attributes {dimension_semantics = [#tpu.dimension_semantics<arbitrary>], iteration_bounds = array<i64: 1>, scalar_prefetch = 0 : i64, scratch_operands = 0 : i64, tpu.core_type = #tpu.core_type<tc>, window_params = [{pipeline_mode = #tpu.pipeline_mode<synchronous>, transform_indices = @transform_0, window_bounds = array<i64: 2, 64, 64>}, {pipeline_mode = #tpu.pipeline_mode<synchronous>, transform_indices = @transform_1, window_bounds = array<i64: 64, 32>}, {pipeline_mode = #tpu.pipeline_mode<synchronous>, transform_indices = @transform_2, window_bounds = array<i64: 1, 32>}, {pipeline_mode = #tpu.pipeline_mode<synchronous>, transform_indices = @transform_3, window_bounds = array<i64: 1, 32>}, {pipeline_mode = #tpu.pipeline_mode<synchronous>, transform_indices = @transform_4, window_bounds = array<i64: 32, 32>}, {pipeline_mode = #tpu.pipeline_mode<synchronous>, transform_indices = @transform_5, window_bounds = array<i64: 2, 64, 32>}]} {
    %c0 = arith.constant 0 : index
    %c0_0 = arith.constant 0 : index
    %c0_1 = arith.constant 0 : index
    %0 = vector.load %arg1[%c0, %c0_0, %c0_1] : memref<2x64x64xbf16, #tpu.memory_space<vmem>>, vector<2x64x64xbf16>
    %1 = vector.shape_cast %0 : vector<2x64x64xbf16> to vector<128x64xbf16>
    %c0_2 = arith.constant 0 : index
    %c0_3 = arith.constant 0 : index
    %2 = vector.load %arg2[%c0_2, %c0_3] : memref<64x32xbf16, #tpu.memory_space<vmem>>, vector<64x32xbf16>
    %cst = arith.constant dense<0.000000e+00> : vector<128x32xf32>
    %3 = tpu.matmul %1, %2, %cst {dimension_numbers = #tpu.dot_dimension_numbers<[1], [0], [0], [1], [0, 0, 1, 1], [], []>} : vector<128x64xbf16>, vector<64x32xbf16>, vector<128x32xf32> -> vector<128x32xf32>
    %4 = vector.shape_cast %3 : vector<128x32xf32> to vector<2x64x32xf32>
    %cst_4 = arith.constant dense<0.000000e+00> : vector<2x32xf32>
    %5 = vector.multi_reduction <add>, %4, %cst_4 [1] : vector<2x64x32xf32> to vector<2x32xf32>
    %c0_5 = arith.constant 0 : index
    %c0_6 = arith.constant 0 : index
    %6 = vector.load %arg5[%c0_5, %c0_6] : memref<32x32xf32, #tpu.memory_space<vmem>>, vector<32x32xf32>
    %cst_7 = arith.constant dense<0.000000e+00> : vector<2x32xf32>
    %7 = tpu.matmul %5, %6, %cst_7 {dimension_numbers = #tpu.dot_dimension_numbers<[1], [0], [0], [1], [0, 0, 1, 1], [], []>, precision = #tpu.contract_precision<fp32>} : vector<2x32xf32>, vector<32x32xf32>, vector<2x32xf32> -> vector<2x32xf32>
    %8 = vector.shape_cast %7 : vector<2x32xf32> to vector<2x1x32xf32>
    %9 = vector.broadcast %8 : vector<2x1x32xf32> to vector<2x64x32xf32>
    %10 = arith.subf %4, %9 : vector<2x64x32xf32>
    %11 = arith.mulf %10, %10 : vector<2x64x32xf32>
    %cst_8 = arith.constant dense<0.000000e+00> : vector<2x32xf32>
    %12 = vector.multi_reduction <add>, %11, %cst_8 [1] : vector<2x64x32xf32> to vector<2x32xf32>
    %c0_9 = arith.constant 0 : index
    %c0_10 = arith.constant 0 : index
    %13 = vector.load %arg5[%c0_9, %c0_10] : memref<32x32xf32, #tpu.memory_space<vmem>>, vector<32x32xf32>
    %cst_11 = arith.constant dense<0.000000e+00> : vector<2x32xf32>
    %14 = tpu.matmul %12, %13, %cst_11 {dimension_numbers = #tpu.dot_dimension_numbers<[1], [0], [0], [1], [0, 0, 1, 1], [], []>, precision = #tpu.contract_precision<fp32>} : vector<2x32xf32>, vector<32x32xf32>, vector<2x32xf32> -> vector<2x32xf32>
    %c0_12 = arith.constant 0 : index
    %c0_13 = arith.constant 0 : index
    %15 = vector.load %arg3[%c0_12, %c0_13] : memref<1x32xf32, #tpu.memory_space<vmem>>, vector<1x32xf32>
    %cst_14 = arith.constant 9.99999974E-6 : f32
    %16 = vector.broadcast %cst_14 : f32 to vector<2x32xf32>
    %17 = arith.addf %14, %16 : vector<2x32xf32>
    %18 = math.rsqrt %17 : vector<2x32xf32>
    %19 = vector.broadcast %15 : vector<1x32xf32> to vector<2x32xf32>
    %20 = arith.mulf %19, %18 : vector<2x32xf32>
    %21 = vector.shape_cast %20 : vector<2x32xf32> to vector<2x1x32xf32>
    %22 = vector.broadcast %21 : vector<2x1x32xf32> to vector<2x64x32xf32>
    %23 = arith.mulf %10, %22 : vector<2x64x32xf32>
    %c0_15 = arith.constant 0 : index
    %c0_16 = arith.constant 0 : index
    %24 = vector.load %arg4[%c0_15, %c0_16] : memref<1x32xf32, #tpu.memory_space<vmem>>, vector<1x32xf32>
    %25 = vector.shape_cast %24 : vector<1x32xf32> to vector<1x1x32xf32>
    %26 = vector.broadcast %25 : vector<1x1x32xf32> to vector<2x64x32xf32>
    %27 = arith.addf %23, %26 : vector<2x64x32xf32>
    %cst_17 = arith.constant 0.000000e+00 : f32
    %28 = vector.broadcast %cst_17 : f32 to vector<2x64x32xf32>
    %29 = arith.cmpf oge, %27, %28 : vector<2x64x32xf32>
    %cst_18 = arith.constant 2.000000e-01 : f32
    %30 = vector.broadcast %cst_18 : f32 to vector<2x64x32xf32>
    %31 = arith.mulf %30, %27 : vector<2x64x32xf32>
    %32 = arith.select %29, %27, %31 : vector<2x64x32xi1>, vector<2x64x32xf32>
    %c0_19 = arith.constant 0 : index
    %c0_20 = arith.constant 0 : index
    %c0_21 = arith.constant 0 : index
    %33 = vector.load %arg6[%c0_19, %c0_20, %c0_21] : memref<2x64x32xf32, #tpu.memory_space<vmem>>, vector<2x64x32xf32>
    tpu.vector_store %arg6[%c0_19, %c0_20, %c0_21], %32 {strides = array<i32>} : memref<2x64x32xf32, #tpu.memory_space<vmem>>, vector<2x64x32xf32>,
    return
  }
  func.func @transform_0(%arg0: i32) -> (i32, i32, i32) {
    %c0_i32 = arith.constant 0 : i32
    %c0_i32_0 = arith.constant 0 : i32
    %c0_i32_1 = arith.constant 0 : i32
    %c0_i32_2 = arith.constant 0 : i32
    return %c0_i32, %c0_i32_0, %c0_i32_1 : i32, i32, i32
  }
  func.func @transform_1(%arg0: i32) -> (i32, i32) {
    %c0_i32 = arith.constant 0 : i32
    %c0_i32_0 = arith.constant 0 : i32
    %c0_i32_1 = arith.constant 0 : i32
    return %c0_i32, %c0_i32_0 : i32, i32
  }
  func.func @transform_2(%arg0: i32) -> (i32, i32) {
    %c0_i32 = arith.constant 0 : i32
    %c0_i32_0 = arith.constant 0 : i32
    %c0_i32_1 = arith.constant 0 : i32
    return %c0_i32, %c0_i32_0 : i32, i32
  }
  func.func @transform_3(%arg0: i32) -> (i32, i32) {
    %c0_i32 = arith.constant 0 : i32
    %c0_i32_0 = arith.constant 0 : i32
    %c0_i32_1 = arith.constant 0 : i32
    return %c0_i32, %c0_i32_0 : i32, i32
  }
  func.func @transform_4(%arg0: i32) -> (i32, i32) {
    %c0_i32 = arith.constant 0 : i32
    %c0_i32_0 = arith.constant 0 : i32
    %c0_i32_1 = arith.constant 0 : i32
    return %c0_i32, %c0_i32_0 : i32, i32
  }
  func.func @transform_5(%arg0: i32) -> (i32, i32, i32) {
    %c0_i32 = arith.constant 0 : i32
    %c0_i32_0 = arith.constant 0 : i32
    %c0_i32_1 = arith.constant 0 : i32
    %c0_i32_2 = arith.constant 0 : i32
    return %c0_i32, %c0_i32_0, %c0_i32_1 : i32, i32, i32
  }
}

module attributes {stable_mosaic.version = 11 : i64} {
  func.func @final_block_kernel(%arg0: i32, %arg1: memref<2x16x512xbf16, #tpu.memory_space<vmem>>, %arg2: memref<512x64xbf16, #tpu.memory_space<vmem>>, %arg3: memref<1x64xf32, #tpu.memory_space<vmem>>, %arg4: memref<1x64xf32, #tpu.memory_space<vmem>>, %arg5: memref<64x64xf32, #tpu.memory_space<vmem>>, %arg6: memref<16x64x32xbf16, #tpu.memory_space<vmem>>, %arg7: memref<2x16x64xf32, #tpu.memory_space<vmem>>, %arg8: memref<2x32xf32, #tpu.memory_space<vmem>>) attributes {dimension_semantics = [#tpu.dimension_semantics<arbitrary>], iteration_bounds = array<i64: 1>, scalar_prefetch = 0 : i64, scratch_operands = 0 : i64, tpu.core_type = #tpu.core_type<tc>, window_params = [{pipeline_mode = #tpu.pipeline_mode<synchronous>, transform_indices = @transform_0, window_bounds = array<i64: 2, 16, 512>}, {pipeline_mode = #tpu.pipeline_mode<synchronous>, transform_indices = @transform_1, window_bounds = array<i64: 512, 64>}, {pipeline_mode = #tpu.pipeline_mode<synchronous>, transform_indices = @transform_2, window_bounds = array<i64: 1, 64>}, {pipeline_mode = #tpu.pipeline_mode<synchronous>, transform_indices = @transform_3, window_bounds = array<i64: 1, 64>}, {pipeline_mode = #tpu.pipeline_mode<synchronous>, transform_indices = @transform_4, window_bounds = array<i64: 64, 64>}, {pipeline_mode = #tpu.pipeline_mode<synchronous>, transform_indices = @transform_5, window_bounds = array<i64: 16, 64, 32>}, {pipeline_mode = #tpu.pipeline_mode<synchronous>, transform_indices = @transform_6, window_bounds = array<i64: 2, 16, 64>}, {pipeline_mode = #tpu.pipeline_mode<synchronous>, transform_indices = @transform_7, window_bounds = array<i64: 2, 32>}]} {
    %c0 = arith.constant 0 : index
    %c0_0 = arith.constant 0 : index
    %c0_1 = arith.constant 0 : index
    %0 = vector.load %arg1[%c0, %c0_0, %c0_1] : memref<2x16x512xbf16, #tpu.memory_space<vmem>>, vector<2x16x512xbf16>
    %1 = vector.shape_cast %0 : vector<2x16x512xbf16> to vector<32x512xbf16>
    %c0_2 = arith.constant 0 : index
    %c0_3 = arith.constant 0 : index
    %2 = vector.load %arg2[%c0_2, %c0_3] : memref<512x64xbf16, #tpu.memory_space<vmem>>, vector<512x64xbf16>
    %cst = arith.constant dense<0.000000e+00> : vector<32x64xf32>
    %3 = tpu.matmul %1, %2, %cst {dimension_numbers = #tpu.dot_dimension_numbers<[1], [0], [0], [1], [0, 0, 1, 1], [], []>} : vector<32x512xbf16>, vector<512x64xbf16>, vector<32x64xf32> -> vector<32x64xf32>
    %4 = vector.shape_cast %3 : vector<32x64xf32> to vector<2x16x64xf32>
    %cst_4 = arith.constant dense<0.000000e+00> : vector<2x64xf32>
    %5 = vector.multi_reduction <add>, %4, %cst_4 [1] : vector<2x16x64xf32> to vector<2x64xf32>
    %c0_5 = arith.constant 0 : index
    %c0_6 = arith.constant 0 : index
    %6 = vector.load %arg5[%c0_5, %c0_6] : memref<64x64xf32, #tpu.memory_space<vmem>>, vector<64x64xf32>
    %cst_7 = arith.constant dense<0.000000e+00> : vector<2x64xf32>
    %7 = tpu.matmul %5, %6, %cst_7 {dimension_numbers = #tpu.dot_dimension_numbers<[1], [0], [0], [1], [0, 0, 1, 1], [], []>, precision = #tpu.contract_precision<fp32>} : vector<2x64xf32>, vector<64x64xf32>, vector<2x64xf32> -> vector<2x64xf32>
    %8 = vector.shape_cast %7 : vector<2x64xf32> to vector<2x1x64xf32>
    %9 = vector.broadcast %8 : vector<2x1x64xf32> to vector<2x16x64xf32>
    %10 = arith.subf %4, %9 : vector<2x16x64xf32>
    %11 = arith.mulf %10, %10 : vector<2x16x64xf32>
    %cst_8 = arith.constant dense<0.000000e+00> : vector<2x64xf32>
    %12 = vector.multi_reduction <add>, %11, %cst_8 [1] : vector<2x16x64xf32> to vector<2x64xf32>
    %c0_9 = arith.constant 0 : index
    %c0_10 = arith.constant 0 : index
    %13 = vector.load %arg5[%c0_9, %c0_10] : memref<64x64xf32, #tpu.memory_space<vmem>>, vector<64x64xf32>
    %cst_11 = arith.constant dense<0.000000e+00> : vector<2x64xf32>
    %14 = tpu.matmul %12, %13, %cst_11 {dimension_numbers = #tpu.dot_dimension_numbers<[1], [0], [0], [1], [0, 0, 1, 1], [], []>, precision = #tpu.contract_precision<fp32>} : vector<2x64xf32>, vector<64x64xf32>, vector<2x64xf32> -> vector<2x64xf32>
    %c0_12 = arith.constant 0 : index
    %c0_13 = arith.constant 0 : index
    %15 = vector.load %arg3[%c0_12, %c0_13] : memref<1x64xf32, #tpu.memory_space<vmem>>, vector<1x64xf32>
    %cst_14 = arith.constant 9.99999974E-6 : f32
    %16 = vector.broadcast %cst_14 : f32 to vector<2x64xf32>
    %17 = arith.addf %14, %16 : vector<2x64xf32>
    %18 = math.rsqrt %17 : vector<2x64xf32>
    %19 = vector.broadcast %15 : vector<1x64xf32> to vector<2x64xf32>
    %20 = arith.mulf %19, %18 : vector<2x64xf32>
    %21 = vector.shape_cast %20 : vector<2x64xf32> to vector<2x1x64xf32>
    %22 = vector.broadcast %21 : vector<2x1x64xf32> to vector<2x16x64xf32>
    %23 = arith.mulf %10, %22 : vector<2x16x64xf32>
    %c0_15 = arith.constant 0 : index
    %c0_16 = arith.constant 0 : index
    %24 = vector.load %arg4[%c0_15, %c0_16] : memref<1x64xf32, #tpu.memory_space<vmem>>, vector<1x64xf32>
    %25 = vector.shape_cast %24 : vector<1x64xf32> to vector<1x1x64xf32>
    %26 = vector.broadcast %25 : vector<1x1x64xf32> to vector<2x16x64xf32>
    %27 = arith.addf %23, %26 : vector<2x16x64xf32>
    %cst_17 = arith.constant 0.000000e+00 : f32
    %28 = vector.broadcast %cst_17 : f32 to vector<2x16x64xf32>
    %29 = arith.cmpf oge, %27, %28 : vector<2x16x64xf32>
    %cst_18 = arith.constant 2.000000e-01 : f32
    %30 = vector.broadcast %cst_18 : f32 to vector<2x16x64xf32>
    %31 = arith.mulf %30, %27 : vector<2x16x64xf32>
    %32 = arith.select %29, %27, %31 : vector<2x16x64xi1>, vector<2x16x64xf32>
    %c0_19 = arith.constant 0 : index
    %c0_20 = arith.constant 0 : index
    %c0_21 = arith.constant 0 : index
    %33 = vector.load %arg7[%c0_19, %c0_20, %c0_21] : memref<2x16x64xf32, #tpu.memory_space<vmem>>, vector<2x16x64xf32>
    tpu.vector_store %arg7[%c0_19, %c0_20, %c0_21], %32 {strides = array<i32>} : memref<2x16x64xf32, #tpu.memory_space<vmem>>, vector<2x16x64xf32>,
    %34 = arith.truncf %32 : vector<2x16x64xf32> to vector<2x16x64xbf16>
    %c0_22 = arith.constant 0 : index
    %c0_23 = arith.constant 0 : index
    %c0_24 = arith.constant 0 : index
    %35 = vector.load %arg6[%c0_22, %c0_23, %c0_24] : memref<16x64x32xbf16, #tpu.memory_space<vmem>>, vector<16x64x32xbf16>
    %cst_25 = arith.constant 0.000000e+00 : f32
    %36 = vector.broadcast %cst_25 : f32 to vector<2x32xf32>
    %37 = vector.extract_strided_slice %34 {offsets = [0, 0, 0], sizes = [2, 1, 64], strides = [1, 1, 1]} : vector<2x16x64xbf16> to vector<2x1x64xbf16>
    %38 = vector.shape_cast %37 : vector<2x1x64xbf16> to vector<2x64xbf16>
    %39 = vector.extract_strided_slice %35 {offsets = [0, 0, 0], sizes = [1, 64, 32], strides = [1, 1, 1]} : vector<16x64x32xbf16> to vector<1x64x32xbf16>
    %40 = vector.shape_cast %39 : vector<1x64x32xbf16> to vector<64x32xbf16>
    %cst_26 = arith.constant dense<0.000000e+00> : vector<2x32xf32>
    %41 = tpu.matmul %38, %40, %cst_26 {dimension_numbers = #tpu.dot_dimension_numbers<[1], [0], [0], [1], [0, 0, 1, 1], [], []>} : vector<2x64xbf16>, vector<64x32xbf16>, vector<2x32xf32> -> vector<2x32xf32>
    %42 = arith.addf %36, %41 : vector<2x32xf32>
    %43 = vector.extract_strided_slice %34 {offsets = [0, 1, 0], sizes = [2, 1, 64], strides = [1, 1, 1]} : vector<2x16x64xbf16> to vector<2x1x64xbf16>
    %44 = vector.shape_cast %43 : vector<2x1x64xbf16> to vector<2x64xbf16>
    %45 = vector.extract_strided_slice %35 {offsets = [1, 0, 0], sizes = [1, 64, 32], strides = [1, 1, 1]} : vector<16x64x32xbf16> to vector<1x64x32xbf16>
    %46 = vector.shape_cast %45 : vector<1x64x32xbf16> to vector<64x32xbf16>
    %cst_27 = arith.constant dense<0.000000e+00> : vector<2x32xf32>
    %47 = tpu.matmul %44, %46, %cst_27 {dimension_numbers = #tpu.dot_dimension_numbers<[1], [0], [0], [1], [0, 0, 1, 1], [], []>} : vector<2x64xbf16>, vector<64x32xbf16>, vector<2x32xf32> -> vector<2x32xf32>
    %48 = arith.addf %42, %47 : vector<2x32xf32>
    %49 = vector.extract_strided_slice %34 {offsets = [0, 2, 0], sizes = [2, 1, 64], strides = [1, 1, 1]} : vector<2x16x64xbf16> to vector<2x1x64xbf16>
    %50 = vector.shape_cast %49 : vector<2x1x64xbf16> to vector<2x64xbf16>
    %51 = vector.extract_strided_slice %35 {offsets = [2, 0, 0], sizes = [1, 64, 32], strides = [1, 1, 1]} : vector<16x64x32xbf16> to vector<1x64x32xbf16>
    %52 = vector.shape_cast %51 : vector<1x64x32xbf16> to vector<64x32xbf16>
    %cst_28 = arith.constant dense<0.000000e+00> : vector<2x32xf32>
    %53 = tpu.matmul %50, %52, %cst_28 {dimension_numbers = #tpu.dot_dimension_numbers<[1], [0], [0], [1], [0, 0, 1, 1], [], []>} : vector<2x64xbf16>, vector<64x32xbf16>, vector<2x32xf32> -> vector<2x32xf32>
    %54 = arith.addf %48, %53 : vector<2x32xf32>
    %55 = vector.extract_strided_slice %34 {offsets = [0, 3, 0], sizes = [2, 1, 64], strides = [1, 1, 1]} : vector<2x16x64xbf16> to vector<2x1x64xbf16>
    %56 = vector.shape_cast %55 : vector<2x1x64xbf16> to vector<2x64xbf16>
    %57 = vector.extract_strided_slice %35 {offsets = [3, 0, 0], sizes = [1, 64, 32], strides = [1, 1, 1]} : vector<16x64x32xbf16> to vector<1x64x32xbf16>
    %58 = vector.shape_cast %57 : vector<1x64x32xbf16> to vector<64x32xbf16>
    %cst_29 = arith.constant dense<0.000000e+00> : vector<2x32xf32>
    %59 = tpu.matmul %56, %58, %cst_29 {dimension_numbers = #tpu.dot_dimension_numbers<[1], [0], [0], [1], [0, 0, 1, 1], [], []>} : vector<2x64xbf16>, vector<64x32xbf16>, vector<2x32xf32> -> vector<2x32xf32>
    %60 = arith.addf %54, %59 : vector<2x32xf32>
    %61 = vector.extract_strided_slice %34 {offsets = [0, 4, 0], sizes = [2, 1, 64], strides = [1, 1, 1]} : vector<2x16x64xbf16> to vector<2x1x64xbf16>
    %62 = vector.shape_cast %61 : vector<2x1x64xbf16> to vector<2x64xbf16>
    %63 = vector.extract_strided_slice %35 {offsets = [4, 0, 0], sizes = [1, 64, 32], strides = [1, 1, 1]} : vector<16x64x32xbf16> to vector<1x64x32xbf16>
    %64 = vector.shape_cast %63 : vector<1x64x32xbf16> to vector<64x32xbf16>
    %cst_30 = arith.constant dense<0.000000e+00> : vector<2x32xf32>
    %65 = tpu.matmul %62, %64, %cst_30 {dimension_numbers = #tpu.dot_dimension_numbers<[1], [0], [0], [1], [0, 0, 1, 1], [], []>} : vector<2x64xbf16>, vector<64x32xbf16>, vector<2x32xf32> -> vector<2x32xf32>
    %66 = arith.addf %60, %65 : vector<2x32xf32>
    %67 = vector.extract_strided_slice %34 {offsets = [0, 5, 0], sizes = [2, 1, 64], strides = [1, 1, 1]} : vector<2x16x64xbf16> to vector<2x1x64xbf16>
    %68 = vector.shape_cast %67 : vector<2x1x64xbf16> to vector<2x64xbf16>
    %69 = vector.extract_strided_slice %35 {offsets = [5, 0, 0], sizes = [1, 64, 32], strides = [1, 1, 1]} : vector<16x64x32xbf16> to vector<1x64x32xbf16>
    %70 = vector.shape_cast %69 : vector<1x64x32xbf16> to vector<64x32xbf16>
    %cst_31 = arith.constant dense<0.000000e+00> : vector<2x32xf32>
    %71 = tpu.matmul %68, %70, %cst_31 {dimension_numbers = #tpu.dot_dimension_numbers<[1], [0], [0], [1], [0, 0, 1, 1], [], []>} : vector<2x64xbf16>, vector<64x32xbf16>, vector<2x32xf32> -> vector<2x32xf32>
    %72 = arith.addf %66, %71 : vector<2x32xf32>
    %73 = vector.extract_strided_slice %34 {offsets = [0, 6, 0], sizes = [2, 1, 64], strides = [1, 1, 1]} : vector<2x16x64xbf16> to vector<2x1x64xbf16>
    %74 = vector.shape_cast %73 : vector<2x1x64xbf16> to vector<2x64xbf16>
    %75 = vector.extract_strided_slice %35 {offsets = [6, 0, 0], sizes = [1, 64, 32], strides = [1, 1, 1]} : vector<16x64x32xbf16> to vector<1x64x32xbf16>
    %76 = vector.shape_cast %75 : vector<1x64x32xbf16> to vector<64x32xbf16>
    %cst_32 = arith.constant dense<0.000000e+00> : vector<2x32xf32>
    %77 = tpu.matmul %74, %76, %cst_32 {dimension_numbers = #tpu.dot_dimension_numbers<[1], [0], [0], [1], [0, 0, 1, 1], [], []>} : vector<2x64xbf16>, vector<64x32xbf16>, vector<2x32xf32> -> vector<2x32xf32>
    %78 = arith.addf %72, %77 : vector<2x32xf32>
    %79 = vector.extract_strided_slice %34 {offsets = [0, 7, 0], sizes = [2, 1, 64], strides = [1, 1, 1]} : vector<2x16x64xbf16> to vector<2x1x64xbf16>
    %80 = vector.shape_cast %79 : vector<2x1x64xbf16> to vector<2x64xbf16>
    %81 = vector.extract_strided_slice %35 {offsets = [7, 0, 0], sizes = [1, 64, 32], strides = [1, 1, 1]} : vector<16x64x32xbf16> to vector<1x64x32xbf16>
    %82 = vector.shape_cast %81 : vector<1x64x32xbf16> to vector<64x32xbf16>
    %cst_33 = arith.constant dense<0.000000e+00> : vector<2x32xf32>
    %83 = tpu.matmul %80, %82, %cst_33 {dimension_numbers = #tpu.dot_dimension_numbers<[1], [0], [0], [1], [0, 0, 1, 1], [], []>} : vector<2x64xbf16>, vector<64x32xbf16>, vector<2x32xf32> -> vector<2x32xf32>
    %84 = arith.addf %78, %83 : vector<2x32xf32>
    %85 = vector.extract_strided_slice %34 {offsets = [0, 8, 0], sizes = [2, 1, 64], strides = [1, 1, 1]} : vector<2x16x64xbf16> to vector<2x1x64xbf16>
    %86 = vector.shape_cast %85 : vector<2x1x64xbf16> to vector<2x64xbf16>
    %87 = vector.extract_strided_slice %35 {offsets = [8, 0, 0], sizes = [1, 64, 32], strides = [1, 1, 1]} : vector<16x64x32xbf16> to vector<1x64x32xbf16>
    %88 = vector.shape_cast %87 : vector<1x64x32xbf16> to vector<64x32xbf16>
    %cst_34 = arith.constant dense<0.000000e+00> : vector<2x32xf32>
    %89 = tpu.matmul %86, %88, %cst_34 {dimension_numbers = #tpu.dot_dimension_numbers<[1], [0], [0], [1], [0, 0, 1, 1], [], []>} : vector<2x64xbf16>, vector<64x32xbf16>, vector<2x32xf32> -> vector<2x32xf32>
    %90 = arith.addf %84, %89 : vector<2x32xf32>
    %91 = vector.extract_strided_slice %34 {offsets = [0, 9, 0], sizes = [2, 1, 64], strides = [1, 1, 1]} : vector<2x16x64xbf16> to vector<2x1x64xbf16>
    %92 = vector.shape_cast %91 : vector<2x1x64xbf16> to vector<2x64xbf16>
    %93 = vector.extract_strided_slice %35 {offsets = [9, 0, 0], sizes = [1, 64, 32], strides = [1, 1, 1]} : vector<16x64x32xbf16> to vector<1x64x32xbf16>
    %94 = vector.shape_cast %93 : vector<1x64x32xbf16> to vector<64x32xbf16>
    %cst_35 = arith.constant dense<0.000000e+00> : vector<2x32xf32>
    %95 = tpu.matmul %92, %94, %cst_35 {dimension_numbers = #tpu.dot_dimension_numbers<[1], [0], [0], [1], [0, 0, 1, 1], [], []>} : vector<2x64xbf16>, vector<64x32xbf16>, vector<2x32xf32> -> vector<2x32xf32>
    %96 = arith.addf %90, %95 : vector<2x32xf32>
    %97 = vector.extract_strided_slice %34 {offsets = [0, 10, 0], sizes = [2, 1, 64], strides = [1, 1, 1]} : vector<2x16x64xbf16> to vector<2x1x64xbf16>
    %98 = vector.shape_cast %97 : vector<2x1x64xbf16> to vector<2x64xbf16>
    %99 = vector.extract_strided_slice %35 {offsets = [10, 0, 0], sizes = [1, 64, 32], strides = [1, 1, 1]} : vector<16x64x32xbf16> to vector<1x64x32xbf16>
    %100 = vector.shape_cast %99 : vector<1x64x32xbf16> to vector<64x32xbf16>
    %cst_36 = arith.constant dense<0.000000e+00> : vector<2x32xf32>
    %101 = tpu.matmul %98, %100, %cst_36 {dimension_numbers = #tpu.dot_dimension_numbers<[1], [0], [0], [1], [0, 0, 1, 1], [], []>} : vector<2x64xbf16>, vector<64x32xbf16>, vector<2x32xf32> -> vector<2x32xf32>
    %102 = arith.addf %96, %101 : vector<2x32xf32>
    %103 = vector.extract_strided_slice %34 {offsets = [0, 11, 0], sizes = [2, 1, 64], strides = [1, 1, 1]} : vector<2x16x64xbf16> to vector<2x1x64xbf16>
    %104 = vector.shape_cast %103 : vector<2x1x64xbf16> to vector<2x64xbf16>
    %105 = vector.extract_strided_slice %35 {offsets = [11, 0, 0], sizes = [1, 64, 32], strides = [1, 1, 1]} : vector<16x64x32xbf16> to vector<1x64x32xbf16>
    %106 = vector.shape_cast %105 : vector<1x64x32xbf16> to vector<64x32xbf16>
    %cst_37 = arith.constant dense<0.000000e+00> : vector<2x32xf32>
    %107 = tpu.matmul %104, %106, %cst_37 {dimension_numbers = #tpu.dot_dimension_numbers<[1], [0], [0], [1], [0, 0, 1, 1], [], []>} : vector<2x64xbf16>, vector<64x32xbf16>, vector<2x32xf32> -> vector<2x32xf32>
    %108 = arith.addf %102, %107 : vector<2x32xf32>
    %109 = vector.extract_strided_slice %34 {offsets = [0, 12, 0], sizes = [2, 1, 64], strides = [1, 1, 1]} : vector<2x16x64xbf16> to vector<2x1x64xbf16>
    %110 = vector.shape_cast %109 : vector<2x1x64xbf16> to vector<2x64xbf16>
    %111 = vector.extract_strided_slice %35 {offsets = [12, 0, 0], sizes = [1, 64, 32], strides = [1, 1, 1]} : vector<16x64x32xbf16> to vector<1x64x32xbf16>
    %112 = vector.shape_cast %111 : vector<1x64x32xbf16> to vector<64x32xbf16>
    %cst_38 = arith.constant dense<0.000000e+00> : vector<2x32xf32>
    %113 = tpu.matmul %110, %112, %cst_38 {dimension_numbers = #tpu.dot_dimension_numbers<[1], [0], [0], [1], [0, 0, 1, 1], [], []>} : vector<2x64xbf16>, vector<64x32xbf16>, vector<2x32xf32> -> vector<2x32xf32>
    %114 = arith.addf %108, %113 : vector<2x32xf32>
    %115 = vector.extract_strided_slice %34 {offsets = [0, 13, 0], sizes = [2, 1, 64], strides = [1, 1, 1]} : vector<2x16x64xbf16> to vector<2x1x64xbf16>
    %116 = vector.shape_cast %115 : vector<2x1x64xbf16> to vector<2x64xbf16>
    %117 = vector.extract_strided_slice %35 {offsets = [13, 0, 0], sizes = [1, 64, 32], strides = [1, 1, 1]} : vector<16x64x32xbf16> to vector<1x64x32xbf16>
    %118 = vector.shape_cast %117 : vector<1x64x32xbf16> to vector<64x32xbf16>
    %cst_39 = arith.constant dense<0.000000e+00> : vector<2x32xf32>
    %119 = tpu.matmul %116, %118, %cst_39 {dimension_numbers = #tpu.dot_dimension_numbers<[1], [0], [0], [1], [0, 0, 1, 1], [], []>} : vector<2x64xbf16>, vector<64x32xbf16>, vector<2x32xf32> -> vector<2x32xf32>
    %120 = arith.addf %114, %119 : vector<2x32xf32>
    %121 = vector.extract_strided_slice %34 {offsets = [0, 14, 0], sizes = [2, 1, 64], strides = [1, 1, 1]} : vector<2x16x64xbf16> to vector<2x1x64xbf16>
    %122 = vector.shape_cast %121 : vector<2x1x64xbf16> to vector<2x64xbf16>
    %123 = vector.extract_strided_slice %35 {offsets = [14, 0, 0], sizes = [1, 64, 32], strides = [1, 1, 1]} : vector<16x64x32xbf16> to vector<1x64x32xbf16>
    %124 = vector.shape_cast %123 : vector<1x64x32xbf16> to vector<64x32xbf16>
    %cst_40 = arith.constant dense<0.000000e+00> : vector<2x32xf32>
    %125 = tpu.matmul %122, %124, %cst_40 {dimension_numbers = #tpu.dot_dimension_numbers<[1], [0], [0], [1], [0, 0, 1, 1], [], []>} : vector<2x64xbf16>, vector<64x32xbf16>, vector<2x32xf32> -> vector<2x32xf32>
    %126 = arith.addf %120, %125 : vector<2x32xf32>
    %127 = vector.extract_strided_slice %34 {offsets = [0, 15, 0], sizes = [2, 1, 64], strides = [1, 1, 1]} : vector<2x16x64xbf16> to vector<2x1x64xbf16>
    %128 = vector.shape_cast %127 : vector<2x1x64xbf16> to vector<2x64xbf16>
    %129 = vector.extract_strided_slice %35 {offsets = [15, 0, 0], sizes = [1, 64, 32], strides = [1, 1, 1]} : vector<16x64x32xbf16> to vector<1x64x32xbf16>
    %130 = vector.shape_cast %129 : vector<1x64x32xbf16> to vector<64x32xbf16>
    %cst_41 = arith.constant dense<0.000000e+00> : vector<2x32xf32>
    %131 = tpu.matmul %128, %130, %cst_41 {dimension_numbers = #tpu.dot_dimension_numbers<[1], [0], [0], [1], [0, 0, 1, 1], [], []>} : vector<2x64xbf16>, vector<64x32xbf16>, vector<2x32xf32> -> vector<2x32xf32>
    %132 = arith.addf %126, %131 : vector<2x32xf32>
    %133 = math.tanh %132 : vector<2x32xf32>
    %c0_42 = arith.constant 0 : index
    %c0_43 = arith.constant 0 : index
    %134 = vector.load %arg8[%c0_42, %c0_43] : memref<2x32xf32, #tpu.memory_space<vmem>>, vector<2x32xf32>
    tpu.vector_store %arg8[%c0_42, %c0_43], %133 {strides = array<i32>} : memref<2x32xf32, #tpu.memory_space<vmem>>, vector<2x32xf32>,
    return
  }
  func.func @transform_0(%arg0: i32) -> (i32, i32, i32) {
    %c0_i32 = arith.constant 0 : i32
    %c0_i32_0 = arith.constant 0 : i32
    %c0_i32_1 = arith.constant 0 : i32
    %c0_i32_2 = arith.constant 0 : i32
    return %c0_i32, %c0_i32_0, %c0_i32_1 : i32, i32, i32
  }
  func.func @transform_1(%arg0: i32) -> (i32, i32) {
    %c0_i32 = arith.constant 0 : i32
    %c0_i32_0 = arith.constant 0 : i32
    %c0_i32_1 = arith.constant 0 : i32
    return %c0_i32, %c0_i32_0 : i32, i32
  }
  func.func @transform_2(%arg0: i32) -> (i32, i32) {
    %c0_i32 = arith.constant 0 : i32
    %c0_i32_0 = arith.constant 0 : i32
    %c0_i32_1 = arith.constant 0 : i32
    return %c0_i32, %c0_i32_0 : i32, i32
  }
  func.func @transform_3(%arg0: i32) -> (i32, i32) {
    %c0_i32 = arith.constant 0 : i32
    %c0_i32_0 = arith.constant 0 : i32
    %c0_i32_1 = arith.constant 0 : i32
    return %c0_i32, %c0_i32_0 : i32, i32
  }
  func.func @transform_4(%arg0: i32) -> (i32, i32) {
    %c0_i32 = arith.constant 0 : i32
    %c0_i32_0 = arith.constant 0 : i32
    %c0_i32_1 = arith.constant 0 : i32
    return %c0_i32, %c0_i32_0 : i32, i32
  }
  func.func @transform_5(%arg0: i32) -> (i32, i32, i32) {
    %c0_i32 = arith.constant 0 : i32
    %c0_i32_0 = arith.constant 0 : i32
    %c0_i32_1 = arith.constant 0 : i32
    %c0_i32_2 = arith.constant 0 : i32
    return %c0_i32, %c0_i32_0, %c0_i32_1 : i32, i32, i32
  }
  func.func @transform_6(%arg0: i32) -> (i32, i32, i32) {
    %c0_i32 = arith.constant 0 : i32
    %c0_i32_0 = arith.constant 0 : i32
    %c0_i32_1 = arith.constant 0 : i32
    %c0_i32_2 = arith.constant 0 : i32
    return %c0_i32, %c0_i32_0, %c0_i32_1 : i32, i32, i32
  }
  func.func @transform_7(%arg0: i32) -> (i32, i32) {
    %c0_i32 = arith.constant 0 : i32
    %c0_i32_0 = arith.constant 0 : i32
    %c0_i32_1 = arith.constant 0 : i32
    return %c0_i32, %c0_i32_0 : i32, i32
  }
}

</mosaic_0001>

<llo_original>
// kernel: base_encoder_forward.2
$region0: #{base_encoder_forward.2}
  #allocation0 [shape = 'u32[]', space=smem, size = 0x4, offset = 0x4, fixed_abs, tag = 'smem constant byte address 0x4 - core index']
  #allocation1 [shape = 'u32[72,128]{1,0:T(1,128)}', space=vmem, size = 0x9000, scoped, tag = 'internal scratch']
  %s0 = inlined_call_operand.vmem [shape: bf16[2,64,64], index: 0, kind: input, shape index: {}]
  %s1 = inlined_call_operand.vmem [shape: bf16[64,32], index: 1, kind: input, shape index: {}]
  %s2 = inlined_call_operand.vmem [shape: f32[1,32], index: 2, kind: input, shape index: {}]
  %s3 = inlined_call_operand.vmem [shape: f32[1,32], index: 3, kind: input, shape index: {}]
  %s4 = inlined_call_operand.vmem [shape: f32[32,32], index: 4, kind: input, shape index: {}]
  %s5 = inlined_call_operand.vmem [shape: f32[2,64,32], index: 5, kind: output, shape index: {}]
  %s6 = sld [smem:[#allocation0]]
  $region30: #{base_encoder_forward.2} parent=0
    _
  %s8 = ssub.s32 1, %s6
  %s9 = scalar_select 0, %s8, %s6
  // Predicated region
  $region2: #{base_encoder_forward.2} parent=0 // pred_check
    _
  $region3: #{base_encoder_forward.2} parent=0 // pred_check_branch
    %11 = sbr.rel (0) target = $region5
  $region4: #{base_encoder_forward.2} parent=0 // pred_region
    _
  $region5: #{base_encoder_forward.2} parent=0 // pred_fallthru
    _
  // Predicated region
  $region6: #{base_encoder_forward.2} parent=0 // pred_check
    _
  $region7: #{base_encoder_forward.2} parent=0 // pred_check_branch
    %13 = sbr.rel (0) target = $region9
  $region8: #{base_encoder_forward.2} parent=0 // pred_region
    _
  $region9: #{base_encoder_forward.2} parent=0 // pred_fallthru
    _
  // Predicated region
  $region10: #{base_encoder_forward.2} parent=0 // pred_check
    _
  $region11: #{base_encoder_forward.2} parent=0 // pred_check_branch
    %15 = sbr.rel (0) target = $region13
  $region12: #{base_encoder_forward.2} parent=0 // pred_region
    _
  $region13: #{base_encoder_forward.2} parent=0 // pred_fallthru
    _
  // Predicated region
  $region14: #{base_encoder_forward.2} parent=0 // pred_check
    _
  $region15: #{base_encoder_forward.2} parent=0 // pred_check_branch
    %17 = sbr.rel (0) target = $region17
  $region16: #{base_encoder_forward.2} parent=0 // pred_region
    _
  $region17: #{base_encoder_forward.2} parent=0 // pred_fallthru
    _
  // Predicated region
  $region18: #{base_encoder_forward.2} parent=0 // pred_check
    _
  $region19: #{base_encoder_forward.2} parent=0 // pred_check_branch
    %19 = sbr.rel (0) target = $region21
  $region20: #{base_encoder_forward.2} parent=0 // pred_region
    _
  $region21: #{base_encoder_forward.2} parent=0 // pred_fallthru
    _
  %v21 = vld [vmem:[%s0] sm:$0xf]
  %v22 = vld [vmem:[%s0 + $0x4] sm:$0xf]
  %v23 = vld [vmem:[%s0 + $0x8] sm:$0xf]
  %v24 = vld [vmem:[%s0 + $0xc] sm:$0xf]
  %v25 = vld [vmem:[%s0 + $0x10] sm:$0xf]
  %v26 = vld [vmem:[%s0 + $0x14] sm:$0xf]
  %v27 = vld [vmem:[%s0 + $0x18] sm:$0xf]
  %v28 = vld [vmem:[%s0 + $0x1c] sm:$0xf]
  %v29 = vld [vmem:[%s0 + $0x20] sm:$0xf]
  %v30 = vld [vmem:[%s0 + $0x24] sm:$0xf]
  %v31 = vld [vmem:[%s0 + $0x28] sm:$0xf]
  %v32 = vld [vmem:[%s0 + $0x2c] sm:$0xf]
  %v33 = vld [vmem:[%s0 + $0x30] sm:$0xf]
  %v34 = vld [vmem:[%s0 + $0x34] sm:$0xf]
  %v35 = vld [vmem:[%s0 + $0x38] sm:$0xf]
  %v36 = vld [vmem:[%s0 + $0x3c] sm:$0xf]
  %v37 = vld [vmem:[%s1] sm:$0xf]
  %v38 = vld [vmem:[%s1 + $0x4] sm:$0xf]
  %v39 = vld [vmem:[%s1 + $0x8] sm:$0xf]
  %v40 = vld [vmem:[%s1 + $0xc] sm:$0xf]
  %v41 = vld [vmem:[%s1 + $0x10] sm:$0xf]
  %v42 = vld [vmem:[%s1 + $0x14] sm:$0xf]
  %v43 = vld [vmem:[%s1 + $0x18] sm:$0xf]
  %v44 = vld [vmem:[%s1 + $0x1c] sm:$0xf]
  %v61 = vunpack.c.l.b16 %v21
  %v62 = vunpack.c.l.b16 %v22
  %v63 = vunpack.c.l.b16 %v23
  %v64 = vunpack.c.l.b16 %v24
  %v65 = vunpack.c.l.b16 %v25
  %v66 = vunpack.c.l.b16 %v26
  %v67 = vunpack.c.l.b16 %v27
  %v68 = vunpack.c.l.b16 %v28
  %v69 = vunpack.c.l.b16 %v29
  %v70 = vunpack.c.l.b16 %v30
  %v71 = vunpack.c.l.b16 %v31
  %v72 = vunpack.c.l.b16 %v32
  %v73 = vunpack.c.l.b16 %v33
  %v74 = vunpack.c.l.b16 %v34
  %v75 = vunpack.c.l.b16 %v35
  %v76 = vunpack.c.l.b16 %v36
  %v77 = vpack.c.b16 %v62, %v61
  %v78 = vpack.c.b16 %v64, %v63
  %v79 = vpack.c.b16 %v66, %v65
  %v80 = vpack.c.b16 %v68, %v67
  %v81 = vpack.c.b16 %v70, %v69
  %v82 = vpack.c.b16 %v72, %v71
  %v83 = vpack.c.b16 %v74, %v73
  %v84 = vpack.c.b16 %v76, %v75
  %v93 = vunpack.c.l.b16 %v37
  %v94 = vunpack.c.l.b16 %v38
  %v95 = vunpack.c.l.b16 %v39
  %v96 = vunpack.c.l.b16 %v40
  %v97 = vunpack.c.l.b16 %v41
  %v98 = vunpack.c.l.b16 %v42
  %v99 = vunpack.c.l.b16 %v43
  %v100 = vunpack.c.l.b16 %v44
  %v101 = vpack.c.b16 %v94, %v93
  %v102 = vpack.c.b16 %v96, %v95
  %v103 = vpack.c.b16 %v98, %v97
  %v104 = vpack.c.b16 %v100, %v99
  %vm109 = vcmask 523264
  %v111 = vsel %vm109, %v77, 0
  %v114 = vsel %vm109, %v78, 0
  %v117 = vsel %vm109, %v79, 0
  %v120 = vsel %vm109, %v80, 0
  %v123 = vsel %vm109, %v81, 0
  %v126 = vsel %vm109, %v82, 0
  %v129 = vsel %vm109, %v83, 0
  %v132 = vsel %vm109, %v84, 0
  %134 = vmatpush.bf16.msra.mxu0 0
  %135 = vmatpush.bf16.msra.mxu0 0
  %136 = vmatpush.bf16.msra.mxu0 0
  %137 = vmatpush.bf16.msra.mxu0 0
  %138 = vmatpush.bf16.msra.mxu0 %v104
  %139 = vmatpush.bf16.msra.mxu0 %v103
  %140 = vmatpush.bf16.msra.mxu0 %v102
  %141 = vmatpush.bf16.msra.mxu0 %v101
  %142 = vmatmul.bf16.gmra.mxu0 %v111
  %v143 = vpop.f32.mrf.mxu0
  %v144 = vadd.f32 0.0, %v143
  %v145 = vpop.f32.mrf.mxu0
  %v146 = vadd.f32 0.0, %v145
  %147 = vmatmul.bf16.gmra.mxu0 %v114
  %v148 = vpop.f32.mrf.mxu0
  %v149 = vadd.f32 0.0, %v148
  %v150 = vpop.f32.mrf.mxu0
  %v151 = vadd.f32 0.0, %v150
  %152 = vmatmul.bf16.gmra.mxu0 %v117
  %v153 = vpop.f32.mrf.mxu0
  %v154 = vadd.f32 0.0, %v153
  %v155 = vpop.f32.mrf.mxu0
  %v156 = vadd.f32 0.0, %v155
  %157 = vmatmul.bf16.gmra.mxu0 %v120
  %v158 = vpop.f32.mrf.mxu0
  %v159 = vadd.f32 0.0, %v158
  %v160 = vpop.f32.mrf.mxu0
  %v161 = vadd.f32 0.0, %v160
  %162 = vmatmul.bf16.gmra.mxu0 %v123
  %v163 = vpop.f32.mrf.mxu0
  %v164 = vadd.f32 0.0, %v163
  %v165 = vpop.f32.mrf.mxu0
  %v166 = vadd.f32 0.0, %v165
  %167 = vmatmul.bf16.gmra.mxu0 %v126
  %v168 = vpop.f32.mrf.mxu0
  %v169 = vadd.f32 0.0, %v168
  %v170 = vpop.f32.mrf.mxu0
  %v171 = vadd.f32 0.0, %v170
  %172 = vmatmul.bf16.gmra.mxu0 %v129
  %v173 = vpop.f32.mrf.mxu0
  %v174 = vadd.f32 0.0, %v173
  %v175 = vpop.f32.mrf.mxu0
  %v176 = vadd.f32 0.0, %v175
  %177 = vmatmul.bf16.gmra.mxu0 %v132
  %v178 = vpop.f32.mrf.mxu0
  %v179 = vadd.f32 0.0, %v178
  %v180 = vpop.f32.mrf.mxu0
  %v181 = vadd.f32 0.0, %v180
  %182 = vdwg.mxu0
  %vm183 = vcmask 261120
  %v184 = vsel %vm183, %v144, 0.0
  %v185 = vsel %vm183, %v146, 0.0
  %v186 = vadd.f32 %v184, %v185
  %v187 = vsel %vm183, %v149, 0.0
  %v188 = vadd.f32 %v186, %v187
  %v189 = vsel %vm183, %v151, 0.0
  %v190 = vadd.f32 %v188, %v189
  %v191 = vsel %vm183, %v154, 0.0
  %v192 = vadd.f32 %v190, %v191
  %v193 = vsel %vm183, %v156, 0.0
  %v194 = vadd.f32 %v192, %v193
  %v195 = vsel %vm183, %v159, 0.0
  %v196 = vadd.f32 %v194, %v195
  %v197 = vsel %vm183, %v161, 0.0
  %v198 = vadd.f32 %v196, %v197
  %v199 = vrot.slane %v198, 4
  %v200 = vadd.f32 %v198, %v199
  %v201 = vrot.slane %v200, 2
  %v202 = vadd.f32 %v200, %v201
  %v203 = vrot.slane %v202, 1
  %v204 = vadd.f32 %v202, %v203
  %v205 = vsel %vm183, %v164, 0.0
  %v206 = vsel %vm183, %v166, 0.0
  %v207 = vadd.f32 %v205, %v206
  %v208 = vsel %vm183, %v169, 0.0
  %v209 = vadd.f32 %v207, %v208
  %v210 = vsel %vm183, %v171, 0.0
  %v211 = vadd.f32 %v209, %v210
  %v212 = vsel %vm183, %v174, 0.0
  %v213 = vadd.f32 %v211, %v212
  %v214 = vsel %vm183, %v176, 0.0
  %v215 = vadd.f32 %v213, %v214
  %v216 = vsel %vm183, %v179, 0.0
  %v217 = vadd.f32 %v215, %v216
  %v218 = vsel %vm183, %v181, 0.0
  %v219 = vadd.f32 %v217, %v218
  %v220 = vrot.slane %v219, 4
  %v221 = vadd.f32 %v219, %v220
  %v222 = vrot.slane %v221, 2
  %v223 = vadd.f32 %v221, %v222
  %v224 = vrot.slane %v223, 1
  %v225 = vadd.f32 %v223, %v224
  %v226 = vld [vmem:[%s4] sm:$0xff]
  %v227 = vld [vmem:[%s4 + $0x8] sm:$0xff]
  %v228 = vld [vmem:[%s4 + $0x10] sm:$0xff]
  %v229 = vld [vmem:[%s4 + $0x18] sm:$0xff]
  %vm232 = vcmask 1041409
  %v233 = vsel %vm232, %v225, %v204
  %v234 = vsel %vm183, %v233, 0
  %236 = vmatpush.msra.mxu0 0.0
  %237 = vmatpush.msra.mxu0 0.0
  %238 = vmatpush.msra.mxu0 0.0
  %239 = vmatpush.msra.mxu0 0.0
  %240 = vmatpush.msra.mxu0 0.0
  %241 = vmatpush.msra.mxu0 0.0
  %242 = vmatpush.msra.mxu0 0.0
  %243 = vmatpush.msra.mxu0 0.0
  %244 = vmatpush.msra.mxu0 0.0
  %245 = vmatpush.msra.mxu0 0.0
  %246 = vmatpush.msra.mxu0 0.0
  %247 = vmatpush.msra.mxu0 0.0
  %v248 = vand.u32 %v229, 4294901760
  %249 = vmatpush.msra.mxu0 %v248
  %v250 = vand.u32 %v228, 4294901760
  %251 = vmatpush.msra.mxu0 %v250
  %v252 = vand.u32 %v227, 4294901760
  %253 = vmatpush.msra.mxu0 %v252
  %v254 = vand.u32 %v226, 4294901760
  %255 = vmatpush.msra.mxu0 %v254
  %v256 = vand.u32 %v234, 4294901760
  %v257 = vsub.f32 %v234, %v256
  %v258 = vand.u32 %v257, 4294901760
  %v259 = vsub.f32 %v257, %v258
  %v260 = vand.u32 %v259, 4294901760
  %261 = vmatmul.f32.gmra.mxu0 %v260
  %v262 = vpop.f32.mrf.mxu0
  %v263 = vadd.f32 0.0, %v262
  %264 = vdwg.mxu0
  %265 = vmatpush.msra.mxu0 0.0
  %266 = vmatpush.msra.mxu0 0.0
  %267 = vmatpush.msra.mxu0 0.0
  %268 = vmatpush.msra.mxu0 0.0
  %269 = vmatpush.msra.mxu0 0.0
  %270 = vmatpush.msra.mxu0 0.0
  %271 = vmatpush.msra.mxu0 0.0
  %272 = vmatpush.msra.mxu0 0.0
  %273 = vmatpush.msra.mxu0 0.0
  %274 = vmatpush.msra.mxu0 0.0
  %275 = vmatpush.msra.mxu0 0.0
  %276 = vmatpush.msra.mxu0 0.0
  %v277 = vand.u32 %v229, 4294901760
  %v278 = vsub.f32 %v229, %v277
  %v279 = vand.u32 %v278, 4294901760
  %v280 = vsub.f32 %v278, %v279
  %v281 = vand.u32 %v280, 4294901760
  %282 = vmatpush.msra.mxu0 %v281
  %v283 = vand.u32 %v228, 4294901760
  %v284 = vsub.f32 %v228, %v283
  %v285 = vand.u32 %v284, 4294901760
  %v286 = vsub.f32 %v284, %v285
  %v287 = vand.u32 %v286, 4294901760
  %288 = vmatpush.msra.mxu0 %v287
  %v289 = vand.u32 %v227, 4294901760
  %v290 = vsub.f32 %v227, %v289
  %v291 = vand.u32 %v290, 4294901760
  %v292 = vsub.f32 %v290, %v291
  %v293 = vand.u32 %v292, 4294901760
  %294 = vmatpush.msra.mxu0 %v293
  %v295 = vand.u32 %v226, 4294901760
  %v296 = vsub.f32 %v226, %v295
  %v297 = vand.u32 %v296, 4294901760
  %v298 = vsub.f32 %v296, %v297
  %v299 = vand.u32 %v298, 4294901760
  %300 = vmatpush.msra.mxu0 %v299
  %v301 = vand.u32 %v234, 4294901760
  %302 = vmatmul.f32.gmra.mxu0 %v301
  %v303 = vpop.f32.mrf.mxu0
  %v304 = vadd.f32 %v263, %v303
  %305 = vdwg.mxu0
  %306 = vmatpush.msra.mxu0 0.0
  %307 = vmatpush.msra.mxu0 0.0
  %308 = vmatpush.msra.mxu0 0.0
  %309 = vmatpush.msra.mxu0 0.0
  %310 = vmatpush.msra.mxu0 0.0
  %311 = vmatpush.msra.mxu0 0.0
  %312 = vmatpush.msra.mxu0 0.0
  %313 = vmatpush.msra.mxu0 0.0
  %314 = vmatpush.msra.mxu0 0.0
  %315 = vmatpush.msra.mxu0 0.0
  %316 = vmatpush.msra.mxu0 0.0
  %317 = vmatpush.msra.mxu0 0.0
  %v318 = vand.u32 %v229, 4294901760
  %v319 = vsub.f32 %v229, %v318
  %320 = vmatpush.msra.mxu0 %v319
  %v321 = vand.u32 %v228, 4294901760
  %v322 = vsub.f32 %v228, %v321
  %323 = vmatpush.msra.mxu0 %v322
  %v324 = vand.u32 %v227, 4294901760
  %v325 = vsub.f32 %v227, %v324
  %326 = vmatpush.msra.mxu0 %v325
  %v327 = vand.u32 %v226, 4294901760
  %v328 = vsub.f32 %v226, %v327
  %329 = vmatpush.msra.mxu0 %v328
  %v330 = vand.u32 %v234, 4294901760
  %v331 = vsub.f32 %v234, %v330
  %332 = vmatmul.f32.gmra.mxu0 %v331
  %v333 = vpop.f32.mrf.mxu0
  %v334 = vadd.f32 %v304, %v333
  %335 = vdwg.mxu0
  %336 = vmatpush.msra.mxu0 0.0
  %337 = vmatpush.msra.mxu0 0.0
  %338 = vmatpush.msra.mxu0 0.0
  %339 = vmatpush.msra.mxu0 0.0
  %340 = vmatpush.msra.mxu0 0.0
  %341 = vmatpush.msra.mxu0 0.0
  %342 = vmatpush.msra.mxu0 0.0
  %343 = vmatpush.msra.mxu0 0.0
  %344 = vmatpush.msra.mxu0 0.0
  %345 = vmatpush.msra.mxu0 0.0
  %346 = vmatpush.msra.mxu0 0.0
  %347 = vmatpush.msra.mxu0 0.0
  %v348 = vand.u32 %v229, 4294901760
  %349 = vmatpush.msra.mxu0 %v348
  %v350 = vand.u32 %v228, 4294901760
  %351 = vmatpush.msra.mxu0 %v350
  %v352 = vand.u32 %v227, 4294901760
  %353 = vmatpush.msra.mxu0 %v352
  %v354 = vand.u32 %v226, 4294901760
  %355 = vmatpush.msra.mxu0 %v354
  %v356 = vand.u32 %v234, 4294901760
  %v357 = vsub.f32 %v234, %v356
  %v358 = vand.u32 %v357, 4294901760
  %359 = vmatmul.f32.gmra.mxu0 %v358
  %v360 = vpop.f32.mrf.mxu0
  %v361 = vadd.f32 %v334, %v360
  %362 = vdwg.mxu0
  %363 = vmatpush.msra.mxu0 0.0
  %364 = vmatpush.msra.mxu0 0.0
  %365 = vmatpush.msra.mxu0 0.0
  %366 = vmatpush.msra.mxu0 0.0
  %367 = vmatpush.msra.mxu0 0.0
  %368 = vmatpush.msra.mxu0 0.0
  %369 = vmatpush.msra.mxu0 0.0
  %370 = vmatpush.msra.mxu0 0.0
  %371 = vmatpush.msra.mxu0 0.0
  %372 = vmatpush.msra.mxu0 0.0
  %373 = vmatpush.msra.mxu0 0.0
  %374 = vmatpush.msra.mxu0 0.0
  %v375 = vand.u32 %v229, 4294901760
  %v376 = vsub.f32 %v229, %v375
  %v377 = vand.u32 %v376, 4294901760
  %378 = vmatpush.msra.mxu0 %v377
  %v379 = vand.u32 %v228, 4294901760
  %v380 = vsub.f32 %v228, %v379
  %v381 = vand.u32 %v380, 4294901760
  %382 = vmatpush.msra.mxu0 %v381
  %v383 = vand.u32 %v227, 4294901760
  %v384 = vsub.f32 %v227, %v383
  %v385 = vand.u32 %v384, 4294901760
  %386 = vmatpush.msra.mxu0 %v385
  %v387 = vand.u32 %v226, 4294901760
  %v388 = vsub.f32 %v226, %v387
  %v389 = vand.u32 %v388, 4294901760
  %390 = vmatpush.msra.mxu0 %v389
  %v391 = vand.u32 %v234, 4294901760
  %392 = vmatmul.f32.gmra.mxu0 %v391
  %v393 = vpop.f32.mrf.mxu0
  %v394 = vadd.f32 %v361, %v393
  %395 = vdwg.mxu0
  %396 = vmatpush.msra.mxu0 0.0
  %397 = vmatpush.msra.mxu0 0.0
  %398 = vmatpush.msra.mxu0 0.0
  %399 = vmatpush.msra.mxu0 0.0
  %400 = vmatpush.msra.mxu0 0.0
  %401 = vmatpush.msra.mxu0 0.0
  %402 = vmatpush.msra.mxu0 0.0
  %403 = vmatpush.msra.mxu0 0.0
  %404 = vmatpush.msra.mxu0 0.0
  %405 = vmatpush.msra.mxu0 0.0
  %406 = vmatpush.msra.mxu0 0.0
  %407 = vmatpush.msra.mxu0 0.0
  %v408 = vand.u32 %v229, 4294901760
  %409 = vmatpush.msra.mxu0 %v408
  %v410 = vand.u32 %v228, 4294901760
  %411 = vmatpush.msra.mxu0 %v410
  %v412 = vand.u32 %v227, 4294901760
  %413 = vmatpush.msra.mxu0 %v412
  %v414 = vand.u32 %v226, 4294901760
  %415 = vmatpush.msra.mxu0 %v414
  %v416 = vand.u32 %v234, 4294901760
  %417 = vmatmul.f32.gmra.mxu0 %v416
  %v418 = vpop.f32.mrf.mxu0
  %v419 = vadd.f32 %v394, %v418
  %420 = vdwg.mxu0
  %v422 = vrot.slane %v419, 1
  %v423 = vperm.slane %v419, 0
  %v424 = vperm.slane %v422, 0
  %v427 = vsub.f32 %v144, %v423
  %v428 = vsub.f32 %v146, %v423
  %v429 = vsub.f32 %v149, %v423
  %v430 = vsub.f32 %v151, %v423
  %v431 = vsub.f32 %v154, %v423
  %v432 = vsub.f32 %v156, %v423
  %v433 = vsub.f32 %v159, %v423
  %v434 = vsub.f32 %v161, %v423
  %v435 = vsub.f32 %v164, %v424
  %v436 = vsub.f32 %v166, %v424
  %v437 = vsub.f32 %v169, %v424
  %v438 = vsub.f32 %v171, %v424
  %v439 = vsub.f32 %v174, %v424
  %v440 = vsub.f32 %v176, %v424
  %v441 = vsub.f32 %v179, %v424
  %v442 = vsub.f32 %v181, %v424
  %v443 = vmul.f32 %v427, %v427
  %v444 = vmul.f32 %v428, %v428
  %v445 = vmul.f32 %v429, %v429
  %v446 = vmul.f32 %v430, %v430
  %v447 = vmul.f32 %v431, %v431
  %v448 = vmul.f32 %v432, %v432
  %v449 = vmul.f32 %v433, %v433
  %v450 = vmul.f32 %v434, %v434
  %v451 = vmul.f32 %v435, %v435
  %v452 = vmul.f32 %v436, %v436
  %v453 = vmul.f32 %v437, %v437
  %v454 = vmul.f32 %v438, %v438
  %v455 = vmul.f32 %v439, %v439
  %v456 = vmul.f32 %v440, %v440
  %v457 = vmul.f32 %v441, %v441
  %v458 = vmul.f32 %v442, %v442
  %v459 = vsel %vm183, %v443, 0.0
  %v460 = vsel %vm183, %v444, 0.0
  %v461 = vadd.f32 %v459, %v460
  %v462 = vsel %vm183, %v445, 0.0
  %v463 = vadd.f32 %v461, %v462
  %v464 = vsel %vm183, %v446, 0.0
  %v465 = vadd.f32 %v463, %v464
  %v466 = vsel %vm183, %v447, 0.0
  %v467 = vadd.f32 %v465, %v466
  %v468 = vsel %vm183, %v448, 0.0
  %v469 = vadd.f32 %v467, %v468
  %v470 = vsel %vm183, %v449, 0.0
  %v471 = vadd.f32 %v469, %v470
  %v472 = vsel %vm183, %v450, 0.0
  %v473 = vadd.f32 %v471, %v472
  %v474 = vrot.slane %v473, 4
  %v475 = vadd.f32 %v473, %v474
  %v476 = vrot.slane %v475, 2
  %v477 = vadd.f32 %v475, %v476
  %v478 = vrot.slane %v477, 1
  %v479 = vadd.f32 %v477, %v478
  %v480 = vsel %vm183, %v451, 0.0
  %v481 = vsel %vm183, %v452, 0.0
  %v482 = vadd.f32 %v480, %v481
  %v483 = vsel %vm183, %v453, 0.0
  %v484 = vadd.f32 %v482, %v483
  %v485 = vsel %vm183, %v454, 0.0
  %v486 = vadd.f32 %v484, %v485
  %v487 = vsel %vm183, %v455, 0.0
  %v488 = vadd.f32 %v486, %v487
  %v489 = vsel %vm183, %v456, 0.0
  %v490 = vadd.f32 %v488, %v489
  %v491 = vsel %vm183, %v457, 0.0
  %v492 = vadd.f32 %v490, %v491
  %v493 = vsel %vm183, %v458, 0.0
  %v494 = vadd.f32 %v492, %v493
  %v495 = vrot.slane %v494, 4
  %v496 = vadd.f32 %v494, %v495
  %v497 = vrot.slane %v496, 2
  %v498 = vadd.f32 %v496, %v497
  %v499 = vrot.slane %v498, 1
  %v500 = vadd.f32 %v498, %v499
  %v501 = vld [vmem:[%s2] sm:$0x1]
  %v504 = vsel %vm232, %v500, %v479
  %v505 = vsel %vm183, %v504, 0
  %507 = vmatpush.msra.mxu0 0.0
  %508 = vmatpush.msra.mxu0 0.0
  %509 = vmatpush.msra.mxu0 0.0
  %510 = vmatpush.msra.mxu0 0.0
  %511 = vmatpush.msra.mxu0 0.0
  %512 = vmatpush.msra.mxu0 0.0
  %513 = vmatpush.msra.mxu0 0.0
  %514 = vmatpush.msra.mxu0 0.0
  %515 = vmatpush.msra.mxu0 0.0
  %516 = vmatpush.msra.mxu0 0.0
  %517 = vmatpush.msra.mxu0 0.0
  %518 = vmatpush.msra.mxu0 0.0
  %v519 = vand.u32 %v229, 4294901760
  %520 = vmatpush.msra.mxu0 %v519
  %v521 = vand.u32 %v228, 4294901760
  %522 = vmatpush.msra.mxu0 %v521
  %v523 = vand.u32 %v227, 4294901760
  %524 = vmatpush.msra.mxu0 %v523
  %v525 = vand.u32 %v226, 4294901760
  %526 = vmatpush.msra.mxu0 %v525
  %v527 = vand.u32 %v505, 4294901760
  %v528 = vsub.f32 %v505, %v527
  %v529 = vand.u32 %v528, 4294901760
  %v530 = vsub.f32 %v528, %v529
  %v531 = vand.u32 %v530, 4294901760
  %532 = vmatmul.f32.gmra.mxu0 %v531
  %v533 = vpop.f32.mrf.mxu0
  %v534 = vadd.f32 1e-05, %v533
  %535 = vdwg.mxu0
  %536 = vmatpush.msra.mxu0 0.0
  %537 = vmatpush.msra.mxu0 0.0
  %538 = vmatpush.msra.mxu0 0.0
  %539 = vmatpush.msra.mxu0 0.0
  %540 = vmatpush.msra.mxu0 0.0
  %541 = vmatpush.msra.mxu0 0.0
  %542 = vmatpush.msra.mxu0 0.0
  %543 = vmatpush.msra.mxu0 0.0
  %544 = vmatpush.msra.mxu0 0.0
  %545 = vmatpush.msra.mxu0 0.0
  %546 = vmatpush.msra.mxu0 0.0
  %547 = vmatpush.msra.mxu0 0.0
  %v548 = vand.u32 %v229, 4294901760
  %v549 = vsub.f32 %v229, %v548
  %v550 = vand.u32 %v549, 4294901760
  %v551 = vsub.f32 %v549, %v550
  %v552 = vand.u32 %v551, 4294901760
  %553 = vmatpush.msra.mxu0 %v552
  %v554 = vand.u32 %v228, 4294901760
  %v555 = vsub.f32 %v228, %v554
  %v556 = vand.u32 %v555, 4294901760
  %v557 = vsub.f32 %v555, %v556
  %v558 = vand.u32 %v557, 4294901760
  %559 = vmatpush.msra.mxu0 %v558
  %v560 = vand.u32 %v227, 4294901760
  %v561 = vsub.f32 %v227, %v560
  %v562 = vand.u32 %v561, 4294901760
  %v563 = vsub.f32 %v561, %v562
  %v564 = vand.u32 %v563, 4294901760
  %565 = vmatpush.msra.mxu0 %v564
  %v566 = vand.u32 %v226, 4294901760
  %v567 = vsub.f32 %v226, %v566
  %v568 = vand.u32 %v567, 4294901760
  %v569 = vsub.f32 %v567, %v568
  %v570 = vand.u32 %v569, 4294901760
  %571 = vmatpush.msra.mxu0 %v570
  %v572 = vand.u32 %v505, 4294901760
  %573 = vmatmul.f32.gmra.mxu0 %v572
  %v574 = vpop.f32.mrf.mxu0
  %v575 = vadd.f32 %v534, %v574
  %576 = vdwg.mxu0
  %577 = vmatpush.msra.mxu0 0.0
  %578 = vmatpush.msra.mxu0 0.0
  %579 = vmatpush.msra.mxu0 0.0
  %580 = vmatpush.msra.mxu0 0.0
  %581 = vmatpush.msra.mxu0 0.0
  %582 = vmatpush.msra.mxu0 0.0
  %583 = vmatpush.msra.mxu0 0.0
  %584 = vmatpush.msra.mxu0 0.0
  %585 = vmatpush.msra.mxu0 0.0
  %586 = vmatpush.msra.mxu0 0.0
  %587 = vmatpush.msra.mxu0 0.0
  %588 = vmatpush.msra.mxu0 0.0
  %v589 = vand.u32 %v229, 4294901760
  %v590 = vsub.f32 %v229, %v589
  %591 = vmatpush.msra.mxu0 %v590
  %v592 = vand.u32 %v228, 4294901760
  %v593 = vsub.f32 %v228, %v592
  %594 = vmatpush.msra.mxu0 %v593
  %v595 = vand.u32 %v227, 4294901760
  %v596 = vsub.f32 %v227, %v595
  %597 = vmatpush.msra.mxu0 %v596
  %v598 = vand.u32 %v226, 4294901760
  %v599 = vsub.f32 %v226, %v598
  %600 = vmatpush.msra.mxu0 %v599
  %v601 = vand.u32 %v505, 4294901760
  %v602 = vsub.f32 %v505, %v601
  %603 = vmatmul.f32.gmra.mxu0 %v602
  %v604 = vpop.f32.mrf.mxu0
  %v605 = vadd.f32 %v575, %v604
  %606 = vdwg.mxu0
  %607 = vmatpush.msra.mxu0 0.0
  %608 = vmatpush.msra.mxu0 0.0
  %609 = vmatpush.msra.mxu0 0.0
  %610 = vmatpush.msra.mxu0 0.0
  %611 = vmatpush.msra.mxu0 0.0
  %612 = vmatpush.msra.mxu0 0.0
  %613 = vmatpush.msra.mxu0 0.0
  %614 = vmatpush.msra.mxu0 0.0
  %615 = vmatpush.msra.mxu0 0.0
  %616 = vmatpush.msra.mxu0 0.0
  %617 = vmatpush.msra.mxu0 0.0
  %618 = vmatpush.msra.mxu0 0.0
  %v619 = vand.u32 %v229, 4294901760
  %620 = vmatpush.msra.mxu0 %v619
  %v621 = vand.u32 %v228, 4294901760
  %622 = vmatpush.msra.mxu0 %v621
  %v623 = vand.u32 %v227, 4294901760
  %624 = vmatpush.msra.mxu0 %v623
  %v625 = vand.u32 %v226, 4294901760
  %626 = vmatpush.msra.mxu0 %v625
  %v627 = vand.u32 %v505, 4294901760
  %v628 = vsub.f32 %v505, %v627
  %v629 = vand.u32 %v628, 4294901760
  %630 = vmatmul.f32.gmra.mxu0 %v629
  %v631 = vpop.f32.mrf.mxu0
  %v632 = vadd.f32 %v605, %v631
  %633 = vdwg.mxu0
  %634 = vmatpush.msra.mxu0 0.0
  %635 = vmatpush.msra.mxu0 0.0
  %636 = vmatpush.msra.mxu0 0.0
  %637 = vmatpush.msra.mxu0 0.0
  %638 = vmatpush.msra.mxu0 0.0
  %639 = vmatpush.msra.mxu0 0.0
  %640 = vmatpush.msra.mxu0 0.0
  %641 = vmatpush.msra.mxu0 0.0
  %642 = vmatpush.msra.mxu0 0.0
  %643 = vmatpush.msra.mxu0 0.0
  %644 = vmatpush.msra.mxu0 0.0
  %645 = vmatpush.msra.mxu0 0.0
  %v646 = vand.u32 %v229, 4294901760
  %v647 = vsub.f32 %v229, %v646
  %v648 = vand.u32 %v647, 4294901760
  %649 = vmatpush.msra.mxu0 %v648
  %v650 = vand.u32 %v228, 4294901760
  %v651 = vsub.f32 %v228, %v650
  %v652 = vand.u32 %v651, 4294901760
  %653 = vmatpush.msra.mxu0 %v652
  %v654 = vand.u32 %v227, 4294901760
  %v655 = vsub.f32 %v227, %v654
  %v656 = vand.u32 %v655, 4294901760
  %657 = vmatpush.msra.mxu0 %v656
  %v658 = vand.u32 %v226, 4294901760
  %v659 = vsub.f32 %v226, %v658
  %v660 = vand.u32 %v659, 4294901760
  %661 = vmatpush.msra.mxu0 %v660
  %v662 = vand.u32 %v505, 4294901760
  %663 = vmatmul.f32.gmra.mxu0 %v662
  %v664 = vpop.f32.mrf.mxu0
  %v665 = vadd.f32 %v632, %v664
  %666 = vdwg.mxu0
  %667 = vmatpush.msra.mxu0 0.0
  %668 = vmatpush.msra.mxu0 0.0
  %669 = vmatpush.msra.mxu0 0.0
  %670 = vmatpush.msra.mxu0 0.0
  %671 = vmatpush.msra.mxu0 0.0
  %672 = vmatpush.msra.mxu0 0.0
  %673 = vmatpush.msra.mxu0 0.0
  %674 = vmatpush.msra.mxu0 0.0
  %675 = vmatpush.msra.mxu0 0.0
  %676 = vmatpush.msra.mxu0 0.0
  %677 = vmatpush.msra.mxu0 0.0
  %678 = vmatpush.msra.mxu0 0.0
  %v679 = vand.u32 %v229, 4294901760
  %680 = vmatpush.msra.mxu0 %v679
  %v681 = vand.u32 %v228, 4294901760
  %682 = vmatpush.msra.mxu0 %v681
  %v683 = vand.u32 %v227, 4294901760
  %684 = vmatpush.msra.mxu0 %v683
  %v685 = vand.u32 %v226, 4294901760
  %686 = vmatpush.msra.mxu0 %v685
  %v687 = vand.u32 %v505, 4294901760
  %688 = vmatmul.f32.gmra.mxu0 %v687
  %v689 = vpop.f32.mrf.mxu0
  %v690 = vadd.f32 %v665, %v689
  %691 = vdwg.mxu0
  %v692 = vrsqrt.pop %v690
  %v693 = vmul.f32 %v692, %v690
  %v694 = vmul.f32 %v693, %v692
  %v695 = vmul.f32 0.5, %v694
  %v696 = vsub.f32 1.5, %v695
  %v697 = vmul.f32 %v692, %v696
  %vm698 = vweird.f32 %v690
  %vm699 = vweird.f32 %v692
  %vm700 = vmor %vm698, %vm699
  %v701 = vsel %vm700, %v692, %v697
  %v703 = vperm.slane %v501, 0
  %v705 = vmul.f32 %v703, %v701
  %v707 = vrot.slane %v705, 1
  %v708 = vperm.slane %v705, 0
  %v709 = vperm.slane %v707, 0
  %v712 = vmul.f32 %v427, %v708
  %v713 = vmul.f32 %v428, %v708
  %v714 = vmul.f32 %v429, %v708
  %v715 = vmul.f32 %v430, %v708
  %v716 = vmul.f32 %v431, %v708
  %v717 = vmul.f32 %v432, %v708
  %v718 = vmul.f32 %v433, %v708
  %v719 = vmul.f32 %v434, %v708
  %v720 = vmul.f32 %v435, %v709
  %v721 = vmul.f32 %v436, %v709
  %v722 = vmul.f32 %v437, %v709
  %v723 = vmul.f32 %v438, %v709
  %v724 = vmul.f32 %v439, %v709
  %v725 = vmul.f32 %v440, %v709
  %v726 = vmul.f32 %v441, %v709
  %v727 = vmul.f32 %v442, %v709
  %v728 = vld [vmem:[%s3] sm:$0x1]
  %v730 = vperm.slane %v728, 0
  %v732 = vadd.f32 %v712, %v730
  %v733 = vadd.f32 %v713, %v730
  %v734 = vadd.f32 %v714, %v730
  %v735 = vadd.f32 %v715, %v730
  %v736 = vadd.f32 %v716, %v730
  %v737 = vadd.f32 %v717, %v730
  %v738 = vadd.f32 %v718, %v730
  %v739 = vadd.f32 %v719, %v730
  %v740 = vadd.f32 %v720, %v730
  %v741 = vadd.f32 %v721, %v730
  %v742 = vadd.f32 %v722, %v730
  %v743 = vadd.f32 %v723, %v730
  %v744 = vadd.f32 %v724, %v730
  %v745 = vadd.f32 %v725, %v730
  %v746 = vadd.f32 %v726, %v730
  %v747 = vadd.f32 %v727, %v730
  %vm748 = vcmp.ge.f32.partialorder %v732, 0.0
  %vm749 = vcmp.ge.f32.partialorder %v733, 0.0
  %vm750 = vcmp.ge.f32.partialorder %v734, 0.0
  %vm751 = vcmp.ge.f32.partialorder %v735, 0.0
  %vm752 = vcmp.ge.f32.partialorder %v736, 0.0
  %vm753 = vcmp.ge.f32.partialorder %v737, 0.0
  %vm754 = vcmp.ge.f32.partialorder %v738, 0.0
  %vm755 = vcmp.ge.f32.partialorder %v739, 0.0
  %vm756 = vcmp.ge.f32.partialorder %v740, 0.0
  %vm757 = vcmp.ge.f32.partialorder %v741, 0.0
  %vm758 = vcmp.ge.f32.partialorder %v742, 0.0
  %vm759 = vcmp.ge.f32.partialorder %v743, 0.0
  %vm760 = vcmp.ge.f32.partialorder %v744, 0.0
  %vm761 = vcmp.ge.f32.partialorder %v745, 0.0
  %vm762 = vcmp.ge.f32.partialorder %v746, 0.0
  %vm763 = vcmp.ge.f32.partialorder %v747, 0.0
  %v764 = vmul.f32 %v732, 0.2
  %v765 = vmul.f32 %v733, 0.2
  %v766 = vmul.f32 %v734, 0.2
  %v767 = vmul.f32 %v735, 0.2
  %v768 = vmul.f32 %v736, 0.2
  %v769 = vmul.f32 %v737, 0.2
  %v770 = vmul.f32 %v738, 0.2
  %v771 = vmul.f32 %v739, 0.2
  %v772 = vmul.f32 %v740, 0.2
  %v773 = vmul.f32 %v741, 0.2
  %v774 = vmul.f32 %v742, 0.2
  %v775 = vmul.f32 %v743, 0.2
  %v776 = vmul.f32 %v744, 0.2
  %v777 = vmul.f32 %v745, 0.2
  %v778 = vmul.f32 %v746, 0.2
  %v779 = vmul.f32 %v747, 0.2
  %v780 = vsel %vm748, %v732, %v764
  %v781 = vsel %vm749, %v733, %v765
  %v782 = vsel %vm750, %v734, %v766
  %v783 = vsel %vm751, %v735, %v767
  %v784 = vsel %vm752, %v736, %v768
  %v785 = vsel %vm753, %v737, %v769
  %v786 = vsel %vm754, %v738, %v770
  %v787 = vsel %vm755, %v739, %v771
  %v788 = vsel %vm756, %v740, %v772
  %v789 = vsel %vm757, %v741, %v773
  %v790 = vsel %vm758, %v742, %v774
  %v791 = vsel %vm759, %v743, %v775
  %v792 = vsel %vm760, %v744, %v776
  %v793 = vsel %vm761, %v745, %v777
  %v794 = vsel %vm762, %v746, %v778
  %v795 = vsel %vm763, %v747, %v779
  %796 = vst.msk [vmem:[%s5] sm:$0xff] %vm183, %v780
  %797 = vst.msk [vmem:[%s5 + $0x8] sm:$0xff] %vm183, %v781
  %798 = vst.msk [vmem:[%s5 + $0x10] sm:$0xff] %vm183, %v782
  %799 = vst.msk [vmem:[%s5 + $0x18] sm:$0xff] %vm183, %v783
  %800 = vst.msk [vmem:[%s5 + $0x20] sm:$0xff] %vm183, %v784
  %801 = vst.msk [vmem:[%s5 + $0x28] sm:$0xff] %vm183, %v785
  %802 = vst.msk [vmem:[%s5 + $0x30] sm:$0xff] %vm183, %v786
  %803 = vst.msk [vmem:[%s5 + $0x38] sm:$0xff] %vm183, %v787
  %804 = vst.msk [vmem:[%s5 + $0x40] sm:$0xff] %vm183, %v788
  %805 = vst.msk [vmem:[%s5 + $0x48] sm:$0xff] %vm183, %v789
  %806 = vst.msk [vmem:[%s5 + $0x50] sm:$0xff] %vm183, %v790
  %807 = vst.msk [vmem:[%s5 + $0x58] sm:$0xff] %vm183, %v791
  %808 = vst.msk [vmem:[%s5 + $0x60] sm:$0xff] %vm183, %v792
  %809 = vst.msk [vmem:[%s5 + $0x68] sm:$0xff] %vm183, %v793
  %810 = vst.msk [vmem:[%s5 + $0x70] sm:$0xff] %vm183, %v794
  %811 = vst.msk [vmem:[%s5 + $0x78] sm:$0xff] %vm183, %v795
  // Predicated region
  $region22: #{base_encoder_forward.2} parent=0 // pred_check
    _
  $region23: #{base_encoder_forward.2} parent=0 // pred_check_branch
    %813 = sbr.rel (0) target = $region25
  $region24: #{base_encoder_forward.2} parent=0 // pred_region
    _
  $region25: #{base_encoder_forward.2} parent=0 // pred_fallthru
    _
  // Predicated region
  $region26: #{base_encoder_forward.2} parent=0 // pred_check
    _
  $region27: #{base_encoder_forward.2} parent=0 // pred_check_branch
    %815 = sbr.rel (0) target = $region29
  $region28: #{base_encoder_forward.2} parent=0 // pred_region
    _
  $region29: #{base_encoder_forward.2} parent=0 // pred_fallthru
    _

// kernel: base_encoder_forward.3
$region0: #{base_encoder_forward.3}
  #allocation0 [shape = 'u32[]', space=smem, size = 0x4, offset = 0x4, fixed_abs, tag = 'smem constant byte address 0x4 - core index']
  #allocation1 [shape = 'u32[72,128]{1,0:T(1,128)}', space=vmem, size = 0x9000, scoped, tag = 'internal scratch']
  %s0 = inlined_call_operand.vmem [shape: bf16[2,16,512], index: 0, kind: input, shape index: {}]
  %s1 = inlined_call_operand.vmem [shape: bf16[512,64], index: 1, kind: input, shape index: {}]
  %s2 = inlined_call_operand.vmem [shape: f32[1,64], index: 2, kind: input, shape index: {}]
  %s3 = inlined_call_operand.vmem [shape: f32[1,64], index: 3, kind: input, shape index: {}]
  %s4 = inlined_call_operand.vmem [shape: f32[64,64], index: 4, kind: input, shape index: {}]
  %s5 = inlined_call_operand.vmem [shape: bf16[16,64,32], index: 5, kind: input, shape index: {}]
  %s6 = inlined_call_operand.hbm [shape: f32[2,16,64], index: 6, kind: output, shape index: {0}]
  %s7 = inlined_call_operand.hbm [shape: f32[2,32], index: 7, kind: output, shape index: {1}]
  %8 = xla_tuple %s6, %s7
  %s9 = sld [smem:[#allocation0]]
  $region42: #{base_encoder_forward.3} parent=0
    _
  %s11 = ssub.s32 1, %s9
  %s12 = scalar_select 0, %s11, %s9
  $region1: #{base_encoder_forward.3} parent=0
    #allocation2 [shape = 'u8[16384]{0}', space=vmem, size = 0x4000, scoped, tag = 'output window, operand 0, single buffered']
    #allocation3 [shape = 's32[1]{0}', space=sflag, size = 0x4, scoped, tag = 'scoped memory for base_encoder_forward.3']
    #allocation4 [shape = 'u8[1024]{0}', space=vmem, size = 0x400, scoped, tag = 'output window, operand 1, single buffered']
    #allocation5 [shape = 's32[1]{0}', space=sflag, size = 0x4, scoped, tag = 'scoped memory for base_encoder_forward.3']
    %13 = vsyncpa [#allocation3], 0
    %14 = vsyncpa [#allocation5], 0
    // Predicated region
    $region2: #{base_encoder_forward.3} parent=1 // pred_check
      _
    $region3: #{base_encoder_forward.3} parent=1 // pred_check_branch
      %16 = sbr.rel (0) target = $region5
    $region4: #{base_encoder_forward.3} parent=1 // pred_region
      _
    $region5: #{base_encoder_forward.3} parent=1 // pred_fallthru
      _
    // Predicated region
    $region6: #{base_encoder_forward.3} parent=1 // pred_check
      _
    $region7: #{base_encoder_forward.3} parent=1 // pred_check_branch
      %18 = sbr.rel (0) target = $region9
    $region8: #{base_encoder_forward.3} parent=1 // pred_region
      _
    $region9: #{base_encoder_forward.3} parent=1 // pred_fallthru
      _
    // Predicated region
    $region10: #{base_encoder_forward.3} parent=1 // pred_check
      _
    $region11: #{base_encoder_forward.3} parent=1 // pred_check_branch
      %20 = sbr.rel (0) target = $region13
    $region12: #{base_encoder_forward.3} parent=1 // pred_region
      _
    $region13: #{base_encoder_forward.3} parent=1 // pred_fallthru
      _
    // Predicated region
    $region14: #{base_encoder_forward.3} parent=1 // pred_check
      _
    $region15: #{base_encoder_forward.3} parent=1 // pred_check_branch
      %22 = sbr.rel (0) target = $region17
    $region16: #{base_encoder_forward.3} parent=1 // pred_region
      _
    $region17: #{base_encoder_forward.3} parent=1 // pred_fallthru
      _
    // Predicated region
    $region18: #{base_encoder_forward.3} parent=1 // pred_check
      _
    $region19: #{base_encoder_forward.3} parent=1 // pred_check_branch
      %24 = sbr.rel (0) target = $region21
    $region20: #{base_encoder_forward.3} parent=1 // pred_region
      _
    $region21: #{base_encoder_forward.3} parent=1 // pred_fallthru
      _
    // Predicated region
    $region22: #{base_encoder_forward.3} parent=1 // pred_check
      _
    $region23: #{base_encoder_forward.3} parent=1 // pred_check_branch
      %26 = sbr.rel (0) target = $region25
    $region24: #{base_encoder_forward.3} parent=1 // pred_region
      _
    $region25: #{base_encoder_forward.3} parent=1 // pred_fallthru
      _
    %v28 = vld [vmem:[%s0] sm:$0xff]
    %v29 = vld [vmem:[%s0 + $0x8] sm:$0xff]
    %v30 = vld [vmem:[%s0 + $0x10] sm:$0xff]
    %v31 = vld [vmem:[%s0 + $0x18] sm:$0xff]
    %v32 = vld [vmem:[%s0 + $0x20] sm:$0xff]
    %v33 = vld [vmem:[%s0 + $0x28] sm:$0xff]
    %v34 = vld [vmem:[%s0 + $0x30] sm:$0xff]
    %v35 = vld [vmem:[%s0 + $0x38] sm:$0xff]
    %v36 = vld [vmem:[%s1] sm:$0xf]
    %v37 = vld [vmem:[%s1 + $0x4] sm:$0xf]
    %v38 = vld [vmem:[%s1 + $0x8] sm:$0xf]
    %v39 = vld [vmem:[%s1 + $0xc] sm:$0xf]
    %v40 = vld [vmem:[%s1 + $0x10] sm:$0xf]
    %v41 = vld [vmem:[%s1 + $0x14] sm:$0xf]
    %v42 = vld [vmem:[%s1 + $0x18] sm:$0xf]
    %v43 = vld [vmem:[%s1 + $0x1c] sm:$0xf]
    %v44 = vld [vmem:[%s1 + $0x20] sm:$0xf]
    %v45 = vld [vmem:[%s1 + $0x24] sm:$0xf]
    %v46 = vld [vmem:[%s1 + $0x28] sm:$0xf]
    %v47 = vld [vmem:[%s1 + $0x2c] sm:$0xf]
    %v48 = vld [vmem:[%s1 + $0x30] sm:$0xf]
    %v49 = vld [vmem:[%s1 + $0x34] sm:$0xf]
    %v50 = vld [vmem:[%s1 + $0x38] sm:$0xf]
    %v51 = vld [vmem:[%s1 + $0x3c] sm:$0xf]
    %v52 = vld [vmem:[%s1 + $0x40] sm:$0xf]
    %v53 = vld [vmem:[%s1 + $0x44] sm:$0xf]
    %v54 = vld [vmem:[%s1 + $0x48] sm:$0xf]
    %v55 = vld [vmem:[%s1 + $0x4c] sm:$0xf]
    %v56 = vld [vmem:[%s1 + $0x50] sm:$0xf]
    %v57 = vld [vmem:[%s1 + $0x54] sm:$0xf]
    %v58 = vld [vmem:[%s1 + $0x58] sm:$0xf]
    %v59 = vld [vmem:[%s1 + $0x5c] sm:$0xf]
    %v60 = vld [vmem:[%s1 + $0x60] sm:$0xf]
    %v61 = vld [vmem:[%s1 + $0x64] sm:$0xf]
    %v62 = vld [vmem:[%s1 + $0x68] sm:$0xf]
    %v63 = vld [vmem:[%s1 + $0x6c] sm:$0xf]
    %v64 = vld [vmem:[%s1 + $0x70] sm:$0xf]
    %v65 = vld [vmem:[%s1 + $0x74] sm:$0xf]
    %v66 = vld [vmem:[%s1 + $0x78] sm:$0xf]
    %v67 = vld [vmem:[%s1 + $0x7c] sm:$0xf]
    %v68 = vld [vmem:[%s1 + $0x80] sm:$0xf]
    %v69 = vld [vmem:[%s1 + $0x84] sm:$0xf]
    %v70 = vld [vmem:[%s1 + $0x88] sm:$0xf]
    %v71 = vld [vmem:[%s1 + $0x8c] sm:$0xf]
    %v72 = vld [vmem:[%s1 + $0x90] sm:$0xf]
    %v73 = vld [vmem:[%s1 + $0x94] sm:$0xf]
    %v74 = vld [vmem:[%s1 + $0x98] sm:$0xf]
    %v75 = vld [vmem:[%s1 + $0x9c] sm:$0xf]
    %v76 = vld [vmem:[%s1 + $0xa0] sm:$0xf]
    %v77 = vld [vmem:[%s1 + $0xa4] sm:$0xf]
    %v78 = vld [vmem:[%s1 + $0xa8] sm:$0xf]
    %v79 = vld [vmem:[%s1 + $0xac] sm:$0xf]
    %v80 = vld [vmem:[%s1 + $0xb0] sm:$0xf]
    %v81 = vld [vmem:[%s1 + $0xb4] sm:$0xf]
    %v82 = vld [vmem:[%s1 + $0xb8] sm:$0xf]
    %v83 = vld [vmem:[%s1 + $0xbc] sm:$0xf]
    %v84 = vld [vmem:[%s1 + $0xc0] sm:$0xf]
    %v85 = vld [vmem:[%s1 + $0xc4] sm:$0xf]
    %v86 = vld [vmem:[%s1 + $0xc8] sm:$0xf]
    %v87 = vld [vmem:[%s1 + $0xcc] sm:$0xf]
    %v88 = vld [vmem:[%s1 + $0xd0] sm:$0xf]
    %v89 = vld [vmem:[%s1 + $0xd4] sm:$0xf]
    %v90 = vld [vmem:[%s1 + $0xd8] sm:$0xf]
    %v91 = vld [vmem:[%s1 + $0xdc] sm:$0xf]
    %v92 = vld [vmem:[%s1 + $0xe0] sm:$0xf]
    %v93 = vld [vmem:[%s1 + $0xe4] sm:$0xf]
    %v94 = vld [vmem:[%s1 + $0xe8] sm:$0xf]
    %v95 = vld [vmem:[%s1 + $0xec] sm:$0xf]
    %v96 = vld [vmem:[%s1 + $0xf0] sm:$0xf]
    %v97 = vld [vmem:[%s1 + $0xf4] sm:$0xf]
    %v98 = vld [vmem:[%s1 + $0xf8] sm:$0xf]
    %v99 = vld [vmem:[%s1 + $0xfc] sm:$0xf]
    %v108 = vunpack.c.l.b16 %v28
    %v109 = vunpack.c.h.b16 %v28
    %v110 = vunpack.c.l.b16 %v29
    %v111 = vunpack.c.h.b16 %v29
    %v112 = vunpack.c.l.b16 %v30
    %v113 = vunpack.c.h.b16 %v30
    %v114 = vunpack.c.l.b16 %v31
    %v115 = vunpack.c.h.b16 %v31
    %v116 = vunpack.c.l.b16 %v32
    %v117 = vunpack.c.h.b16 %v32
    %v118 = vunpack.c.l.b16 %v33
    %v119 = vunpack.c.h.b16 %v33
    %v120 = vunpack.c.l.b16 %v34
    %v121 = vunpack.c.h.b16 %v34
    %v122 = vunpack.c.l.b16 %v35
    %v123 = vunpack.c.h.b16 %v35
    %v124 = vpack.c.b16 %v112, %v108
    %v125 = vpack.c.b16 %v113, %v109
    %v126 = vpack.c.b16 %v114, %v110
    %v127 = vpack.c.b16 %v115, %v111
    %v128 = vpack.c.b16 %v120, %v116
    %v129 = vpack.c.b16 %v121, %v117
    %v130 = vpack.c.b16 %v122, %v118
    %v131 = vpack.c.b16 %v123, %v119
    %v204 = vunpack.c.l.b16 %v36
    %v205 = vunpack.c.l.b16 %v37
    %v206 = vunpack.c.l.b16 %v38
    %v207 = vunpack.c.l.b16 %v39
    %v208 = vunpack.c.l.b16 %v40
    %v209 = vunpack.c.l.b16 %v41
    %v210 = vunpack.c.l.b16 %v42
    %v211 = vunpack.c.l.b16 %v43
    %v212 = vunpack.c.l.b16 %v44
    %v213 = vunpack.c.l.b16 %v45
    %v214 = vunpack.c.l.b16 %v46
    %v215 = vunpack.c.l.b16 %v47
    %v216 = vunpack.c.l.b16 %v48
    %v217 = vunpack.c.l.b16 %v49
    %v218 = vunpack.c.l.b16 %v50
    %v219 = vunpack.c.l.b16 %v51
    %v220 = vunpack.c.l.b16 %v52
    %v221 = vunpack.c.l.b16 %v53
    %v222 = vunpack.c.l.b16 %v54
    %v223 = vunpack.c.l.b16 %v55
    %v224 = vunpack.c.l.b16 %v56
    %v225 = vunpack.c.l.b16 %v57
    %v226 = vunpack.c.l.b16 %v58
    %v227 = vunpack.c.l.b16 %v59
    %v228 = vunpack.c.l.b16 %v60
    %v229 = vunpack.c.l.b16 %v61
    %v230 = vunpack.c.l.b16 %v62
    %v231 = vunpack.c.l.b16 %v63
    %v232 = vunpack.c.l.b16 %v64
    %v233 = vunpack.c.l.b16 %v65
    %v234 = vunpack.c.l.b16 %v66
    %v235 = vunpack.c.l.b16 %v67
    %v236 = vunpack.c.l.b16 %v68
    %v237 = vunpack.c.l.b16 %v69
    %v238 = vunpack.c.l.b16 %v70
    %v239 = vunpack.c.l.b16 %v71
    %v240 = vunpack.c.l.b16 %v72
    %v241 = vunpack.c.l.b16 %v73
    %v242 = vunpack.c.l.b16 %v74
    %v243 = vunpack.c.l.b16 %v75
    %v244 = vunpack.c.l.b16 %v76
    %v245 = vunpack.c.l.b16 %v77
    %v246 = vunpack.c.l.b16 %v78
    %v247 = vunpack.c.l.b16 %v79
    %v248 = vunpack.c.l.b16 %v80
    %v249 = vunpack.c.l.b16 %v81
    %v250 = vunpack.c.l.b16 %v82
    %v251 = vunpack.c.l.b16 %v83
    %v252 = vunpack.c.l.b16 %v84
    %v253 = vunpack.c.l.b16 %v85
    %v254 = vunpack.c.l.b16 %v86
    %v255 = vunpack.c.l.b16 %v87
    %v256 = vunpack.c.l.b16 %v88
    %v257 = vunpack.c.l.b16 %v89
    %v258 = vunpack.c.l.b16 %v90
    %v259 = vunpack.c.l.b16 %v91
    %v260 = vunpack.c.l.b16 %v92
    %v261 = vunpack.c.l.b16 %v93
    %v262 = vunpack.c.l.b16 %v94
    %v263 = vunpack.c.l.b16 %v95
    %v264 = vunpack.c.l.b16 %v96
    %v265 = vunpack.c.l.b16 %v97
    %v266 = vunpack.c.l.b16 %v98
    %v267 = vunpack.c.l.b16 %v99
    %v268 = vpack.c.b16 %v205, %v204
    %v269 = vpack.c.b16 %v207, %v206
    %v270 = vpack.c.b16 %v209, %v208
    %v271 = vpack.c.b16 %v211, %v210
    %v272 = vpack.c.b16 %v213, %v212
    %v273 = vpack.c.b16 %v215, %v214
    %v274 = vpack.c.b16 %v217, %v216
    %v275 = vpack.c.b16 %v219, %v218
    %v276 = vpack.c.b16 %v221, %v220
    %v277 = vpack.c.b16 %v223, %v222
    %v278 = vpack.c.b16 %v225, %v224
    %v279 = vpack.c.b16 %v227, %v226
    %v280 = vpack.c.b16 %v229, %v228
    %v281 = vpack.c.b16 %v231, %v230
    %v282 = vpack.c.b16 %v233, %v232
    %v283 = vpack.c.b16 %v235, %v234
    %v284 = vpack.c.b16 %v237, %v236
    %v285 = vpack.c.b16 %v239, %v238
    %v286 = vpack.c.b16 %v241, %v240
    %v287 = vpack.c.b16 %v243, %v242
    %v288 = vpack.c.b16 %v245, %v244
    %v289 = vpack.c.b16 %v247, %v246
    %v290 = vpack.c.b16 %v249, %v248
    %v291 = vpack.c.b16 %v251, %v250
    %v292 = vpack.c.b16 %v253, %v252
    %v293 = vpack.c.b16 %v255, %v254
    %v294 = vpack.c.b16 %v257, %v256
    %v295 = vpack.c.b16 %v259, %v258
    %v296 = vpack.c.b16 %v261, %v260
    %v297 = vpack.c.b16 %v263, %v262
    %v298 = vpack.c.b16 %v265, %v264
    %v299 = vpack.c.b16 %v267, %v266
    %332 = vmatpush.bf16.msra.mxu0 %v275
    %333 = vmatpush.bf16.msra.mxu0 %v274
    %334 = vmatpush.bf16.msra.mxu0 %v273
    %335 = vmatpush.bf16.msra.mxu0 %v272
    %336 = vmatpush.bf16.msra.mxu0 %v271
    %337 = vmatpush.bf16.msra.mxu0 %v270
    %338 = vmatpush.bf16.msra.mxu0 %v269
    %339 = vmatpush.bf16.msra.mxu0 %v268
    %340 = vmatmul.bf16.gmra.mxu0 %v124
    %v341 = vpop.f32.mrf.mxu0
    %v342 = vadd.f32 0.0, %v341
    %v343 = vpop.f32.mrf.mxu0
    %v344 = vadd.f32 0.0, %v343
    %345 = vmatmul.bf16.gmra.mxu0 %v128
    %v346 = vpop.f32.mrf.mxu0
    %v347 = vadd.f32 0.0, %v346
    %v348 = vpop.f32.mrf.mxu0
    %v349 = vadd.f32 0.0, %v348
    %350 = vdwg.mxu0
    %351 = vmatpush.bf16.msra.mxu0 %v283
    %352 = vmatpush.bf16.msra.mxu0 %v282
    %353 = vmatpush.bf16.msra.mxu0 %v281
    %354 = vmatpush.bf16.msra.mxu0 %v280
    %355 = vmatpush.bf16.msra.mxu0 %v279
    %356 = vmatpush.bf16.msra.mxu0 %v278
    %357 = vmatpush.bf16.msra.mxu0 %v277
    %358 = vmatpush.bf16.msra.mxu0 %v276
    %359 = vmatmul.bf16.gmra.mxu0 %v125
    %v360 = vpop.f32.mrf.mxu0
    %v361 = vadd.f32 %v342, %v360
    %v362 = vpop.f32.mrf.mxu0
    %v363 = vadd.f32 %v344, %v362
    %364 = vmatmul.bf16.gmra.mxu0 %v129
    %v365 = vpop.f32.mrf.mxu0
    %v366 = vadd.f32 %v347, %v365
    %v367 = vpop.f32.mrf.mxu0
    %v368 = vadd.f32 %v349, %v367
    %369 = vdwg.mxu0
    %370 = vmatpush.bf16.msra.mxu0 %v291
    %371 = vmatpush.bf16.msra.mxu0 %v290
    %372 = vmatpush.bf16.msra.mxu0 %v289
    %373 = vmatpush.bf16.msra.mxu0 %v288
    %374 = vmatpush.bf16.msra.mxu0 %v287
    %375 = vmatpush.bf16.msra.mxu0 %v286
    %376 = vmatpush.bf16.msra.mxu0 %v285
    %377 = vmatpush.bf16.msra.mxu0 %v284
    %378 = vmatmul.bf16.gmra.mxu0 %v126
    %v379 = vpop.f32.mrf.mxu0
    %v380 = vadd.f32 %v361, %v379
    %v381 = vpop.f32.mrf.mxu0
    %v382 = vadd.f32 %v363, %v381
    %383 = vmatmul.bf16.gmra.mxu0 %v130
    %v384 = vpop.f32.mrf.mxu0
    %v385 = vadd.f32 %v366, %v384
    %v386 = vpop.f32.mrf.mxu0
    %v387 = vadd.f32 %v368, %v386
    %388 = vdwg.mxu0
    %389 = vmatpush.bf16.msra.mxu0 %v299
    %390 = vmatpush.bf16.msra.mxu0 %v298
    %391 = vmatpush.bf16.msra.mxu0 %v297
    %392 = vmatpush.bf16.msra.mxu0 %v296
    %393 = vmatpush.bf16.msra.mxu0 %v295
    %394 = vmatpush.bf16.msra.mxu0 %v294
    %395 = vmatpush.bf16.msra.mxu0 %v293
    %396 = vmatpush.bf16.msra.mxu0 %v292
    %397 = vmatmul.bf16.gmra.mxu0 %v127
    %v398 = vpop.f32.mrf.mxu0
    %v399 = vadd.f32 %v380, %v398
    %v400 = vpop.f32.mrf.mxu0
    %v401 = vadd.f32 %v382, %v400
    %402 = vmatmul.bf16.gmra.mxu0 %v131
    %v403 = vpop.f32.mrf.mxu0
    %v404 = vadd.f32 %v385, %v403
    %v405 = vpop.f32.mrf.mxu0
    %v406 = vadd.f32 %v387, %v405
    %407 = vdwg.mxu0
    %vm408 = vcmask 523264
    %v409 = vsel %vm408, %v399, 0.0
    %v410 = vsel %vm408, %v401, 0.0
    %v411 = vadd.f32 %v409, %v410
    %v412 = vrot.slane %v411, 4
    %v413 = vadd.f32 %v411, %v412
    %v414 = vrot.slane %v413, 2
    %v415 = vadd.f32 %v413, %v414
    %v416 = vrot.slane %v415, 1
    %v417 = vadd.f32 %v415, %v416
    %v418 = vsel %vm408, %v404, 0.0
    %v419 = vsel %vm408, %v406, 0.0
    %v420 = vadd.f32 %v418, %v419
    %v421 = vrot.slane %v420, 4
    %v422 = vadd.f32 %v420, %v421
    %v423 = vrot.slane %v422, 2
    %v424 = vadd.f32 %v422, %v423
    %v425 = vrot.slane %v424, 1
    %v426 = vadd.f32 %v424, %v425
    %v427 = vld [vmem:[%s4] sm:$0xff]
    %v428 = vld [vmem:[%s4 + $0x8] sm:$0xff]
    %v429 = vld [vmem:[%s4 + $0x10] sm:$0xff]
    %v430 = vld [vmem:[%s4 + $0x18] sm:$0xff]
    %v431 = vld [vmem:[%s4 + $0x20] sm:$0xff]
    %v432 = vld [vmem:[%s4 + $0x28] sm:$0xff]
    %v433 = vld [vmem:[%s4 + $0x30] sm:$0xff]
    %v434 = vld [vmem:[%s4 + $0x38] sm:$0xff]
    %vm437 = vcmask 1041409
    %v438 = vsel %vm437, %v426, %v417
    %v439 = vsel %vm408, %v438, 0
    %441 = vmatpush.msra.mxu0 0.0
    %442 = vmatpush.msra.mxu0 0.0
    %443 = vmatpush.msra.mxu0 0.0
    %444 = vmatpush.msra.mxu0 0.0
    %445 = vmatpush.msra.mxu0 0.0
    %446 = vmatpush.msra.mxu0 0.0
    %447 = vmatpush.msra.mxu0 0.0
    %448 = vmatpush.msra.mxu0 0.0
    %v449 = vand.u32 %v434, 4294901760
    %450 = vmatpush.msra.mxu0 %v449
    %v451 = vand.u32 %v433, 4294901760
    %452 = vmatpush.msra.mxu0 %v451
    %v453 = vand.u32 %v432, 4294901760
    %454 = vmatpush.msra.mxu0 %v453
    %v455 = vand.u32 %v431, 4294901760
    %456 = vmatpush.msra.mxu0 %v455
    %v457 = vand.u32 %v430, 4294901760
    %458 = vmatpush.msra.mxu0 %v457
    %v459 = vand.u32 %v429, 4294901760
    %460 = vmatpush.msra.mxu0 %v459
    %v461 = vand.u32 %v428, 4294901760
    %462 = vmatpush.msra.mxu0 %v461
    %v463 = vand.u32 %v427, 4294901760
    %464 = vmatpush.msra.mxu0 %v463
    %v465 = vand.u32 %v439, 4294901760
    %v466 = vsub.f32 %v439, %v465
    %v467 = vand.u32 %v466, 4294901760
    %v468 = vsub.f32 %v466, %v467
    %v469 = vand.u32 %v468, 4294901760
    %470 = vmatmul.f32.gmra.mxu0 %v469
    %v471 = vpop.f32.mrf.mxu0
    %v472 = vadd.f32 0.0, %v471
    %473 = vdwg.mxu0
    %474 = vmatpush.msra.mxu0 0.0
    %475 = vmatpush.msra.mxu0 0.0
    %476 = vmatpush.msra.mxu0 0.0
    %477 = vmatpush.msra.mxu0 0.0
    %478 = vmatpush.msra.mxu0 0.0
    %479 = vmatpush.msra.mxu0 0.0
    %480 = vmatpush.msra.mxu0 0.0
    %481 = vmatpush.msra.mxu0 0.0
    %v482 = vand.u32 %v434, 4294901760
    %v483 = vsub.f32 %v434, %v482
    %v484 = vand.u32 %v483, 4294901760
    %v485 = vsub.f32 %v483, %v484
    %v486 = vand.u32 %v485, 4294901760
    %487 = vmatpush.msra.mxu0 %v486
    %v488 = vand.u32 %v433, 4294901760
    %v489 = vsub.f32 %v433, %v488
    %v490 = vand.u32 %v489, 4294901760
    %v491 = vsub.f32 %v489, %v490
    %v492 = vand.u32 %v491, 4294901760
    %493 = vmatpush.msra.mxu0 %v492
    %v494 = vand.u32 %v432, 4294901760
    %v495 = vsub.f32 %v432, %v494
    %v496 = vand.u32 %v495, 4294901760
    %v497 = vsub.f32 %v495, %v496
    %v498 = vand.u32 %v497, 4294901760
    %499 = vmatpush.msra.mxu0 %v498
    %v500 = vand.u32 %v431, 4294901760
    %v501 = vsub.f32 %v431, %v500
    %v502 = vand.u32 %v501, 4294901760
    %v503 = vsub.f32 %v501, %v502
    %v504 = vand.u32 %v503, 4294901760
    %505 = vmatpush.msra.mxu0 %v504
    %v506 = vand.u32 %v430, 4294901760
    %v507 = vsub.f32 %v430, %v506
    %v508 = vand.u32 %v507, 4294901760
    %v509 = vsub.f32 %v507, %v508
    %v510 = vand.u32 %v509, 4294901760
    %511 = vmatpush.msra.mxu0 %v510
    %v512 = vand.u32 %v429, 4294901760
    %v513 = vsub.f32 %v429, %v512
    %v514 = vand.u32 %v513, 4294901760
    %v515 = vsub.f32 %v513, %v514
    %v516 = vand.u32 %v515, 4294901760
    %517 = vmatpush.msra.mxu0 %v516
    %v518 = vand.u32 %v428, 4294901760
    %v519 = vsub.f32 %v428, %v518
    %v520 = vand.u32 %v519, 4294901760
    %v521 = vsub.f32 %v519, %v520
    %v522 = vand.u32 %v521, 4294901760
    %523 = vmatpush.msra.mxu0 %v522
    %v524 = vand.u32 %v427, 4294901760
    %v525 = vsub.f32 %v427, %v524
    %v526 = vand.u32 %v525, 4294901760
    %v527 = vsub.f32 %v525, %v526
    %v528 = vand.u32 %v527, 4294901760
    %529 = vmatpush.msra.mxu0 %v528
    %v530 = vand.u32 %v439, 4294901760
    %531 = vmatmul.f32.gmra.mxu0 %v530
    %v532 = vpop.f32.mrf.mxu0
    %v533 = vadd.f32 %v472, %v532
    %534 = vdwg.mxu0
    %535 = vmatpush.msra.mxu0 0.0
    %536 = vmatpush.msra.mxu0 0.0
    %537 = vmatpush.msra.mxu0 0.0
    %538 = vmatpush.msra.mxu0 0.0
    %539 = vmatpush.msra.mxu0 0.0
    %540 = vmatpush.msra.mxu0 0.0
    %541 = vmatpush.msra.mxu0 0.0
    %542 = vmatpush.msra.mxu0 0.0
    %v543 = vand.u32 %v434, 4294901760
    %v544 = vsub.f32 %v434, %v543
    %545 = vmatpush.msra.mxu0 %v544
    %v546 = vand.u32 %v433, 4294901760
    %v547 = vsub.f32 %v433, %v546
    %548 = vmatpush.msra.mxu0 %v547
    %v549 = vand.u32 %v432, 4294901760
    %v550 = vsub.f32 %v432, %v549
    %551 = vmatpush.msra.mxu0 %v550
    %v552 = vand.u32 %v431, 4294901760
    %v553 = vsub.f32 %v431, %v552
    %554 = vmatpush.msra.mxu0 %v553
    %v555 = vand.u32 %v430, 4294901760
    %v556 = vsub.f32 %v430, %v555
    %557 = vmatpush.msra.mxu0 %v556
    %v558 = vand.u32 %v429, 4294901760
    %v559 = vsub.f32 %v429, %v558
    %560 = vmatpush.msra.mxu0 %v559
    %v561 = vand.u32 %v428, 4294901760
    %v562 = vsub.f32 %v428, %v561
    %563 = vmatpush.msra.mxu0 %v562
    %v564 = vand.u32 %v427, 4294901760
    %v565 = vsub.f32 %v427, %v564
    %566 = vmatpush.msra.mxu0 %v565
    %v567 = vand.u32 %v439, 4294901760
    %v568 = vsub.f32 %v439, %v567
    %569 = vmatmul.f32.gmra.mxu0 %v568
    %v570 = vpop.f32.mrf.mxu0
    %v571 = vadd.f32 %v533, %v570
    %572 = vdwg.mxu0
    %573 = vmatpush.msra.mxu0 0.0
    %574 = vmatpush.msra.mxu0 0.0
    %575 = vmatpush.msra.mxu0 0.0
    %576 = vmatpush.msra.mxu0 0.0
    %577 = vmatpush.msra.mxu0 0.0
    %578 = vmatpush.msra.mxu0 0.0
    %579 = vmatpush.msra.mxu0 0.0
    %580 = vmatpush.msra.mxu0 0.0
    %v581 = vand.u32 %v434, 4294901760
    %582 = vmatpush.msra.mxu0 %v581
    %v583 = vand.u32 %v433, 4294901760
    %584 = vmatpush.msra.mxu0 %v583
    %v585 = vand.u32 %v432, 4294901760
    %586 = vmatpush.msra.mxu0 %v585
    %v587 = vand.u32 %v431, 4294901760
    %588 = vmatpush.msra.mxu0 %v587
    %v589 = vand.u32 %v430, 4294901760
    %590 = vmatpush.msra.mxu0 %v589
    %v591 = vand.u32 %v429, 4294901760
    %592 = vmatpush.msra.mxu0 %v591
    %v593 = vand.u32 %v428, 4294901760
    %594 = vmatpush.msra.mxu0 %v593
    %v595 = vand.u32 %v427, 4294901760
    %596 = vmatpush.msra.mxu0 %v595
    %v597 = vand.u32 %v439, 4294901760
    %v598 = vsub.f32 %v439, %v597
    %v599 = vand.u32 %v598, 4294901760
    %600 = vmatmul.f32.gmra.mxu0 %v599
    %v601 = vpop.f32.mrf.mxu0
    %v602 = vadd.f32 %v571, %v601
    %603 = vdwg.mxu0
    %604 = vmatpush.msra.mxu0 0.0
    %605 = vmatpush.msra.mxu0 0.0
    %606 = vmatpush.msra.mxu0 0.0
    %607 = vmatpush.msra.mxu0 0.0
    %608 = vmatpush.msra.mxu0 0.0
    %609 = vmatpush.msra.mxu0 0.0
    %610 = vmatpush.msra.mxu0 0.0
    %611 = vmatpush.msra.mxu0 0.0
    %v612 = vand.u32 %v434, 4294901760
    %v613 = vsub.f32 %v434, %v612
    %v614 = vand.u32 %v613, 4294901760
    %615 = vmatpush.msra.mxu0 %v614
    %v616 = vand.u32 %v433, 4294901760
    %v617 = vsub.f32 %v433, %v616
    %v618 = vand.u32 %v617, 4294901760
    %619 = vmatpush.msra.mxu0 %v618
    %v620 = vand.u32 %v432, 4294901760
    %v621 = vsub.f32 %v432, %v620
    %v622 = vand.u32 %v621, 4294901760
    %623 = vmatpush.msra.mxu0 %v622
    %v624 = vand.u32 %v431, 4294901760
    %v625 = vsub.f32 %v431, %v624
    %v626 = vand.u32 %v625, 4294901760
    %627 = vmatpush.msra.mxu0 %v626
    %v628 = vand.u32 %v430, 4294901760
    %v629 = vsub.f32 %v430, %v628
    %v630 = vand.u32 %v629, 4294901760
    %631 = vmatpush.msra.mxu0 %v630
    %v632 = vand.u32 %v429, 4294901760
    %v633 = vsub.f32 %v429, %v632
    %v634 = vand.u32 %v633, 4294901760
    %635 = vmatpush.msra.mxu0 %v634
    %v636 = vand.u32 %v428, 4294901760
    %v637 = vsub.f32 %v428, %v636
    %v638 = vand.u32 %v637, 4294901760
    %639 = vmatpush.msra.mxu0 %v638
    %v640 = vand.u32 %v427, 4294901760
    %v641 = vsub.f32 %v427, %v640
    %v642 = vand.u32 %v641, 4294901760
    %643 = vmatpush.msra.mxu0 %v642
    %v644 = vand.u32 %v439, 4294901760
    %645 = vmatmul.f32.gmra.mxu0 %v644
    %v646 = vpop.f32.mrf.mxu0
    %v647 = vadd.f32 %v602, %v646
    %648 = vdwg.mxu0
    %649 = vmatpush.msra.mxu0 0.0
    %650 = vmatpush.msra.mxu0 0.0
    %651 = vmatpush.msra.mxu0 0.0
    %652 = vmatpush.msra.mxu0 0.0
    %653 = vmatpush.msra.mxu0 0.0
    %654 = vmatpush.msra.mxu0 0.0
    %655 = vmatpush.msra.mxu0 0.0
    %656 = vmatpush.msra.mxu0 0.0
    %v657 = vand.u32 %v434, 4294901760
    %658 = vmatpush.msra.mxu0 %v657
    %v659 = vand.u32 %v433, 4294901760
    %660 = vmatpush.msra.mxu0 %v659
    %v661 = vand.u32 %v432, 4294901760
    %662 = vmatpush.msra.mxu0 %v661
    %v663 = vand.u32 %v431, 4294901760
    %664 = vmatpush.msra.mxu0 %v663
    %v665 = vand.u32 %v430, 4294901760
    %666 = vmatpush.msra.mxu0 %v665
    %v667 = vand.u32 %v429, 4294901760
    %668 = vmatpush.msra.mxu0 %v667
    %v669 = vand.u32 %v428, 4294901760
    %670 = vmatpush.msra.mxu0 %v669
    %v671 = vand.u32 %v427, 4294901760
    %672 = vmatpush.msra.mxu0 %v671
    %v673 = vand.u32 %v439, 4294901760
    %674 = vmatmul.f32.gmra.mxu0 %v673
    %v675 = vpop.f32.mrf.mxu0
    %v676 = vadd.f32 %v647, %v675
    %677 = vdwg.mxu0
    %v679 = vrot.slane %v676, 1
    %v680 = vperm.slane %v676, 0
    %v681 = vperm.slane %v679, 0
    %v684 = vsub.f32 %v399, %v680
    %v685 = vsub.f32 %v401, %v680
    %v686 = vsub.f32 %v404, %v681
    %v687 = vsub.f32 %v406, %v681
    %v688 = vmul.f32 %v684, %v684
    %v689 = vmul.f32 %v685, %v685
    %v690 = vmul.f32 %v686, %v686
    %v691 = vmul.f32 %v687, %v687
    %v692 = vsel %vm408, %v688, 0.0
    %v693 = vsel %vm408, %v689, 0.0
    %v694 = vadd.f32 %v692, %v693
    %v695 = vrot.slane %v694, 4
    %v696 = vadd.f32 %v694, %v695
    %v697 = vrot.slane %v696, 2
    %v698 = vadd.f32 %v696, %v697
    %v699 = vrot.slane %v698, 1
    %v700 = vadd.f32 %v698, %v699
    %v701 = vsel %vm408, %v690, 0.0
    %v702 = vsel %vm408, %v691, 0.0
    %v703 = vadd.f32 %v701, %v702
    %v704 = vrot.slane %v703, 4
    %v705 = vadd.f32 %v703, %v704
    %v706 = vrot.slane %v705, 2
    %v707 = vadd.f32 %v705, %v706
    %v708 = vrot.slane %v707, 1
    %v709 = vadd.f32 %v707, %v708
    %v710 = vld [vmem:[%s2] sm:$0x1]
    %v713 = vsel %vm437, %v709, %v700
    %v714 = vsel %vm408, %v713, 0
    %716 = vmatpush.msra.mxu0 0.0
    %717 = vmatpush.msra.mxu0 0.0
    %718 = vmatpush.msra.mxu0 0.0
    %719 = vmatpush.msra.mxu0 0.0
    %720 = vmatpush.msra.mxu0 0.0
    %721 = vmatpush.msra.mxu0 0.0
    %722 = vmatpush.msra.mxu0 0.0
    %723 = vmatpush.msra.mxu0 0.0
    %v724 = vand.u32 %v434, 4294901760
    %725 = vmatpush.msra.mxu0 %v724
    %v726 = vand.u32 %v433, 4294901760
    %727 = vmatpush.msra.mxu0 %v726
    %v728 = vand.u32 %v432, 4294901760
    %729 = vmatpush.msra.mxu0 %v728
    %v730 = vand.u32 %v431, 4294901760
    %731 = vmatpush.msra.mxu0 %v730
    %v732 = vand.u32 %v430, 4294901760
    %733 = vmatpush.msra.mxu0 %v732
    %v734 = vand.u32 %v429, 4294901760
    %735 = vmatpush.msra.mxu0 %v734
    %v736 = vand.u32 %v428, 4294901760
    %737 = vmatpush.msra.mxu0 %v736
    %v738 = vand.u32 %v427, 4294901760
    %739 = vmatpush.msra.mxu0 %v738
    %v740 = vand.u32 %v714, 4294901760
    %v741 = vsub.f32 %v714, %v740
    %v742 = vand.u32 %v741, 4294901760
    %v743 = vsub.f32 %v741, %v742
    %v744 = vand.u32 %v743, 4294901760
    %745 = vmatmul.f32.gmra.mxu0 %v744
    %v746 = vpop.f32.mrf.mxu0
    %v747 = vadd.f32 1e-05, %v746
    %748 = vdwg.mxu0
    %749 = vmatpush.msra.mxu0 0.0
    %750 = vmatpush.msra.mxu0 0.0
    %751 = vmatpush.msra.mxu0 0.0
    %752 = vmatpush.msra.mxu0 0.0
    %753 = vmatpush.msra.mxu0 0.0
    %754 = vmatpush.msra.mxu0 0.0
    %755 = vmatpush.msra.mxu0 0.0
    %756 = vmatpush.msra.mxu0 0.0
    %v757 = vand.u32 %v434, 4294901760
    %v758 = vsub.f32 %v434, %v757
    %v759 = vand.u32 %v758, 4294901760
    %v760 = vsub.f32 %v758, %v759
    %v761 = vand.u32 %v760, 4294901760
    %762 = vmatpush.msra.mxu0 %v761
    %v763 = vand.u32 %v433, 4294901760
    %v764 = vsub.f32 %v433, %v763
    %v765 = vand.u32 %v764, 4294901760
    %v766 = vsub.f32 %v764, %v765
    %v767 = vand.u32 %v766, 4294901760
    %768 = vmatpush.msra.mxu0 %v767
    %v769 = vand.u32 %v432, 4294901760
    %v770 = vsub.f32 %v432, %v769
    %v771 = vand.u32 %v770, 4294901760
    %v772 = vsub.f32 %v770, %v771
    %v773 = vand.u32 %v772, 4294901760
    %774 = vmatpush.msra.mxu0 %v773
    %v775 = vand.u32 %v431, 4294901760
    %v776 = vsub.f32 %v431, %v775
    %v777 = vand.u32 %v776, 4294901760
    %v778 = vsub.f32 %v776, %v777
    %v779 = vand.u32 %v778, 4294901760
    %780 = vmatpush.msra.mxu0 %v779
    %v781 = vand.u32 %v430, 4294901760
    %v782 = vsub.f32 %v430, %v781
    %v783 = vand.u32 %v782, 4294901760
    %v784 = vsub.f32 %v782, %v783
    %v785 = vand.u32 %v784, 4294901760
    %786 = vmatpush.msra.mxu0 %v785
    %v787 = vand.u32 %v429, 4294901760
    %v788 = vsub.f32 %v429, %v787
    %v789 = vand.u32 %v788, 4294901760
    %v790 = vsub.f32 %v788, %v789
    %v791 = vand.u32 %v790, 4294901760
    %792 = vmatpush.msra.mxu0 %v791
    %v793 = vand.u32 %v428, 4294901760
    %v794 = vsub.f32 %v428, %v793
    %v795 = vand.u32 %v794, 4294901760
    %v796 = vsub.f32 %v794, %v795
    %v797 = vand.u32 %v796, 4294901760
    %798 = vmatpush.msra.mxu0 %v797
    %v799 = vand.u32 %v427, 4294901760
    %v800 = vsub.f32 %v427, %v799
    %v801 = vand.u32 %v800, 4294901760
    %v802 = vsub.f32 %v800, %v801
    %v803 = vand.u32 %v802, 4294901760
    %804 = vmatpush.msra.mxu0 %v803
    %v805 = vand.u32 %v714, 4294901760
    %806 = vmatmul.f32.gmra.mxu0 %v805
    %v807 = vpop.f32.mrf.mxu0
    %v808 = vadd.f32 %v747, %v807
    %809 = vdwg.mxu0
    %810 = vmatpush.msra.mxu0 0.0
    %811 = vmatpush.msra.mxu0 0.0
    %812 = vmatpush.msra.mxu0 0.0
    %813 = vmatpush.msra.mxu0 0.0
    %814 = vmatpush.msra.mxu0 0.0
    %815 = vmatpush.msra.mxu0 0.0
    %816 = vmatpush.msra.mxu0 0.0
    %817 = vmatpush.msra.mxu0 0.0
    %v818 = vand.u32 %v434, 4294901760
    %v819 = vsub.f32 %v434, %v818
    %820 = vmatpush.msra.mxu0 %v819
    %v821 = vand.u32 %v433, 4294901760
    %v822 = vsub.f32 %v433, %v821
    %823 = vmatpush.msra.mxu0 %v822
    %v824 = vand.u32 %v432, 4294901760
    %v825 = vsub.f32 %v432, %v824
    %826 = vmatpush.msra.mxu0 %v825
    %v827 = vand.u32 %v431, 4294901760
    %v828 = vsub.f32 %v431, %v827
    %829 = vmatpush.msra.mxu0 %v828
    %v830 = vand.u32 %v430, 4294901760
    %v831 = vsub.f32 %v430, %v830
    %832 = vmatpush.msra.mxu0 %v831
    %v833 = vand.u32 %v429, 4294901760
    %v834 = vsub.f32 %v429, %v833
    %835 = vmatpush.msra.mxu0 %v834
    %v836 = vand.u32 %v428, 4294901760
    %v837 = vsub.f32 %v428, %v836
    %838 = vmatpush.msra.mxu0 %v837
    %v839 = vand.u32 %v427, 4294901760
    %v840 = vsub.f32 %v427, %v839
    %841 = vmatpush.msra.mxu0 %v840
    %v842 = vand.u32 %v714, 4294901760
    %v843 = vsub.f32 %v714, %v842
    %844 = vmatmul.f32.gmra.mxu0 %v843
    %v845 = vpop.f32.mrf.mxu0
    %v846 = vadd.f32 %v808, %v845
    %847 = vdwg.mxu0
    %848 = vmatpush.msra.mxu0 0.0
    %849 = vmatpush.msra.mxu0 0.0
    %850 = vmatpush.msra.mxu0 0.0
    %851 = vmatpush.msra.mxu0 0.0
    %852 = vmatpush.msra.mxu0 0.0
    %853 = vmatpush.msra.mxu0 0.0
    %854 = vmatpush.msra.mxu0 0.0
    %855 = vmatpush.msra.mxu0 0.0
    %v856 = vand.u32 %v434, 4294901760
    %857 = vmatpush.msra.mxu0 %v856
    %v858 = vand.u32 %v433, 4294901760
    %859 = vmatpush.msra.mxu0 %v858
    %v860 = vand.u32 %v432, 4294901760
    %861 = vmatpush.msra.mxu0 %v860
    %v862 = vand.u32 %v431, 4294901760
    %863 = vmatpush.msra.mxu0 %v862
    %v864 = vand.u32 %v430, 4294901760
    %865 = vmatpush.msra.mxu0 %v864
    %v866 = vand.u32 %v429, 4294901760
    %867 = vmatpush.msra.mxu0 %v866
    %v868 = vand.u32 %v428, 4294901760
    %869 = vmatpush.msra.mxu0 %v868
    %v870 = vand.u32 %v427, 4294901760
    %871 = vmatpush.msra.mxu0 %v870
    %v872 = vand.u32 %v714, 4294901760
    %v873 = vsub.f32 %v714, %v872
    %v874 = vand.u32 %v873, 4294901760
    %875 = vmatmul.f32.gmra.mxu0 %v874
    %v876 = vpop.f32.mrf.mxu0
    %v877 = vadd.f32 %v846, %v876
    %878 = vdwg.mxu0
    %879 = vmatpush.msra.mxu0 0.0
    %880 = vmatpush.msra.mxu0 0.0
    %881 = vmatpush.msra.mxu0 0.0
    %882 = vmatpush.msra.mxu0 0.0
    %883 = vmatpush.msra.mxu0 0.0
    %884 = vmatpush.msra.mxu0 0.0
    %885 = vmatpush.msra.mxu0 0.0
    %886 = vmatpush.msra.mxu0 0.0
    %v887 = vand.u32 %v434, 4294901760
    %v888 = vsub.f32 %v434, %v887
    %v889 = vand.u32 %v888, 4294901760
    %890 = vmatpush.msra.mxu0 %v889
    %v891 = vand.u32 %v433, 4294901760
    %v892 = vsub.f32 %v433, %v891
    %v893 = vand.u32 %v892, 4294901760
    %894 = vmatpush.msra.mxu0 %v893
    %v895 = vand.u32 %v432, 4294901760
    %v896 = vsub.f32 %v432, %v895
    %v897 = vand.u32 %v896, 4294901760
    %898 = vmatpush.msra.mxu0 %v897
    %v899 = vand.u32 %v431, 4294901760
    %v900 = vsub.f32 %v431, %v899
    %v901 = vand.u32 %v900, 4294901760
    %902 = vmatpush.msra.mxu0 %v901
    %v903 = vand.u32 %v430, 4294901760
    %v904 = vsub.f32 %v430, %v903
    %v905 = vand.u32 %v904, 4294901760
    %906 = vmatpush.msra.mxu0 %v905
    %v907 = vand.u32 %v429, 4294901760
    %v908 = vsub.f32 %v429, %v907
    %v909 = vand.u32 %v908, 4294901760
    %910 = vmatpush.msra.mxu0 %v909
    %v911 = vand.u32 %v428, 4294901760
    %v912 = vsub.f32 %v428, %v911
    %v913 = vand.u32 %v912, 4294901760
    %914 = vmatpush.msra.mxu0 %v913
    %v915 = vand.u32 %v427, 4294901760
    %v916 = vsub.f32 %v427, %v915
    %v917 = vand.u32 %v916, 4294901760
    %918 = vmatpush.msra.mxu0 %v917
    %v919 = vand.u32 %v714, 4294901760
    %920 = vmatmul.f32.gmra.mxu0 %v919
    %v921 = vpop.f32.mrf.mxu0
    %v922 = vadd.f32 %v877, %v921
    %923 = vdwg.mxu0
    %924 = vmatpush.msra.mxu0 0.0
    %925 = vmatpush.msra.mxu0 0.0
    %926 = vmatpush.msra.mxu0 0.0
    %927 = vmatpush.msra.mxu0 0.0
    %928 = vmatpush.msra.mxu0 0.0
    %929 = vmatpush.msra.mxu0 0.0
    %930 = vmatpush.msra.mxu0 0.0
    %931 = vmatpush.msra.mxu0 0.0
    %v932 = vand.u32 %v434, 4294901760
    %933 = vmatpush.msra.mxu0 %v932
    %v934 = vand.u32 %v433, 4294901760
    %935 = vmatpush.msra.mxu0 %v934
    %v936 = vand.u32 %v432, 4294901760
    %937 = vmatpush.msra.mxu0 %v936
    %v938 = vand.u32 %v431, 4294901760
    %939 = vmatpush.msra.mxu0 %v938
    %v940 = vand.u32 %v430, 4294901760
    %941 = vmatpush.msra.mxu0 %v940
    %v942 = vand.u32 %v429, 4294901760
    %943 = vmatpush.msra.mxu0 %v942
    %v944 = vand.u32 %v428, 4294901760
    %945 = vmatpush.msra.mxu0 %v944
    %v946 = vand.u32 %v427, 4294901760
    %947 = vmatpush.msra.mxu0 %v946
    %v948 = vand.u32 %v714, 4294901760
    %949 = vmatmul.f32.gmra.mxu0 %v948
    %v950 = vpop.f32.mrf.mxu0
    %v951 = vadd.f32 %v922, %v950
    %952 = vdwg.mxu0
    %v953 = vrsqrt.pop %v951
    %v954 = vmul.f32 %v953, %v951
    %v955 = vmul.f32 %v954, %v953
    %v956 = vmul.f32 0.5, %v955
    %v957 = vsub.f32 1.5, %v956
    %v958 = vmul.f32 %v953, %v957
    %vm959 = vweird.f32 %v951
    %vm960 = vweird.f32 %v953
    %vm961 = vmor %vm959, %vm960
    %v962 = vsel %vm961, %v953, %v958
    %v964 = vperm.slane %v710, 0
    %v966 = vmul.f32 %v964, %v962
    %v968 = vrot.slane %v966, 1
    %v969 = vperm.slane %v966, 0
    %v970 = vperm.slane %v968, 0
    %v973 = vmul.f32 %v684, %v969
    %v974 = vmul.f32 %v685, %v969
    %v975 = vmul.f32 %v686, %v970
    %v976 = vmul.f32 %v687, %v970
    %v977 = vld [vmem:[%s3] sm:$0x1]
    %v979 = vperm.slane %v977, 0
    %v981 = vadd.f32 %v973, %v979
    %v982 = vadd.f32 %v974, %v979
    %v983 = vadd.f32 %v975, %v979
    %v984 = vadd.f32 %v976, %v979
    %vm985 = vcmp.ge.f32.partialorder %v981, 0.0
    %vm986 = vcmp.ge.f32.partialorder %v982, 0.0
    %vm987 = vcmp.ge.f32.partialorder %v983, 0.0
    %vm988 = vcmp.ge.f32.partialorder %v984, 0.0
    %v989 = vmul.f32 %v981, 0.2
    %v990 = vmul.f32 %v982, 0.2
    %v991 = vmul.f32 %v983, 0.2
    %v992 = vmul.f32 %v984, 0.2
    %v993 = vsel %vm985, %v981, %v989
    %v994 = vsel %vm986, %v982, %v990
    %v995 = vsel %vm987, %v983, %v991
    %v996 = vsel %vm988, %v984, %v992
    %997 = vst.msk [vmem:[#allocation2] sm:$0xff] %vm408, %v993
    %998 = vst.msk [vmem:[#allocation2 + $0x8] sm:$0xff] %vm408, %v994
    %999 = vst.msk [vmem:[#allocation2 + $0x10] sm:$0xff] %vm408, %v995
    %1000 = vst.msk [vmem:[#allocation2 + $0x18] sm:$0xff] %vm408, %v996
    %v1001 = vpack.c.bf16 %v993, %v993
    %v1002 = vpack.c.bf16 %v994, %v994
    %v1003 = vpack.c.bf16 %v995, %v995
    %v1004 = vpack.c.bf16 %v996, %v996
    %v1005 = vld [vmem:[%s5] sm:$0xf]
    %v1006 = vld [vmem:[%s5 + $0x4] sm:$0xf]
    %v1007 = vld [vmem:[%s5 + $0x8] sm:$0xf]
    %v1008 = vld [vmem:[%s5 + $0xc] sm:$0xf]
    %v1009 = vld [vmem:[%s5 + $0x10] sm:$0xf]
    %v1010 = vld [vmem:[%s5 + $0x14] sm:$0xf]
    %v1011 = vld [vmem:[%s5 + $0x18] sm:$0xf]
    %v1012 = vld [vmem:[%s5 + $0x1c] sm:$0xf]
    %v1013 = vld [vmem:[%s5 + $0x20] sm:$0xf]
    %v1014 = vld [vmem:[%s5 + $0x24] sm:$0xf]
    %v1015 = vld [vmem:[%s5 + $0x28] sm:$0xf]
    %v1016 = vld [vmem:[%s5 + $0x2c] sm:$0xf]
    %v1017 = vld [vmem:[%s5 + $0x30] sm:$0xf]
    %v1018 = vld [vmem:[%s5 + $0x34] sm:$0xf]
    %v1019 = vld [vmem:[%s5 + $0x38] sm:$0xf]
    %v1020 = vld [vmem:[%s5 + $0x3c] sm:$0xf]
    %v1021 = vld [vmem:[%s5 + $0x40] sm:$0xf]
    %v1022 = vld [vmem:[%s5 + $0x44] sm:$0xf]
    %v1023 = vld [vmem:[%s5 + $0x48] sm:$0xf]
    %v1024 = vld [vmem:[%s5 + $0x4c] sm:$0xf]
    %v1025 = vld [vmem:[%s5 + $0x50] sm:$0xf]
    %v1026 = vld [vmem:[%s5 + $0x54] sm:$0xf]
    %v1027 = vld [vmem:[%s5 + $0x58] sm:$0xf]
    %v1028 = vld [vmem:[%s5 + $0x5c] sm:$0xf]
    %v1029 = vld [vmem:[%s5 + $0x60] sm:$0xf]
    %v1030 = vld [vmem:[%s5 + $0x64] sm:$0xf]
    %v1031 = vld [vmem:[%s5 + $0x68] sm:$0xf]
    %v1032 = vld [vmem:[%s5 + $0x6c] sm:$0xf]
    %v1033 = vld [vmem:[%s5 + $0x70] sm:$0xf]
    %v1034 = vld [vmem:[%s5 + $0x74] sm:$0xf]
    %v1035 = vld [vmem:[%s5 + $0x78] sm:$0xf]
    %v1036 = vld [vmem:[%s5 + $0x7c] sm:$0xf]
    %v1037 = vld [vmem:[%s5 + $0x80] sm:$0xf]
    %v1038 = vld [vmem:[%s5 + $0x84] sm:$0xf]
    %v1039 = vld [vmem:[%s5 + $0x88] sm:$0xf]
    %v1040 = vld [vmem:[%s5 + $0x8c] sm:$0xf]
    %v1041 = vld [vmem:[%s5 + $0x90] sm:$0xf]
    %v1042 = vld [vmem:[%s5 + $0x94] sm:$0xf]
    %v1043 = vld [vmem:[%s5 + $0x98] sm:$0xf]
    %v1044 = vld [vmem:[%s5 + $0x9c] sm:$0xf]
    %v1045 = vld [vmem:[%s5 + $0xa0] sm:$0xf]
    %v1046 = vld [vmem:[%s5 + $0xa4] sm:$0xf]
    %v1047 = vld [vmem:[%s5 + $0xa8] sm:$0xf]
    %v1048 = vld [vmem:[%s5 + $0xac] sm:$0xf]
    %v1049 = vld [vmem:[%s5 + $0xb0] sm:$0xf]
    %v1050 = vld [vmem:[%s5 + $0xb4] sm:$0xf]
    %v1051 = vld [vmem:[%s5 + $0xb8] sm:$0xf]
    %v1052 = vld [vmem:[%s5 + $0xbc] sm:$0xf]
    %v1053 = vld [vmem:[%s5 + $0xc0] sm:$0xf]
    %v1054 = vld [vmem:[%s5 + $0xc4] sm:$0xf]
    %v1055 = vld [vmem:[%s5 + $0xc8] sm:$0xf]
    %v1056 = vld [vmem:[%s5 + $0xcc] sm:$0xf]
    %v1057 = vld [vmem:[%s5 + $0xd0] sm:$0xf]
    %v1058 = vld [vmem:[%s5 + $0xd4] sm:$0xf]
    %v1059 = vld [vmem:[%s5 + $0xd8] sm:$0xf]
    %v1060 = vld [vmem:[%s5 + $0xdc] sm:$0xf]
    %v1061 = vld [vmem:[%s5 + $0xe0] sm:$0xf]
    %v1062 = vld [vmem:[%s5 + $0xe4] sm:$0xf]
    %v1063 = vld [vmem:[%s5 + $0xe8] sm:$0xf]
    %v1064 = vld [vmem:[%s5 + $0xec] sm:$0xf]
    %v1065 = vld [vmem:[%s5 + $0xf0] sm:$0xf]
    %v1066 = vld [vmem:[%s5 + $0xf4] sm:$0xf]
    %v1067 = vld [vmem:[%s5 + $0xf8] sm:$0xf]
    %v1068 = vld [vmem:[%s5 + $0xfc] sm:$0xf]
    %v1069 = vld [vmem:[%s5 + $0x100] sm:$0xf]
    %v1070 = vld [vmem:[%s5 + $0x104] sm:$0xf]
    %v1071 = vld [vmem:[%s5 + $0x108] sm:$0xf]
    %v1072 = vld [vmem:[%s5 + $0x10c] sm:$0xf]
    %v1073 = vld [vmem:[%s5 + $0x110] sm:$0xf]
    %v1074 = vld [vmem:[%s5 + $0x114] sm:$0xf]
    %v1075 = vld [vmem:[%s5 + $0x118] sm:$0xf]
    %v1076 = vld [vmem:[%s5 + $0x11c] sm:$0xf]
    %v1077 = vld [vmem:[%s5 + $0x120] sm:$0xf]
    %v1078 = vld [vmem:[%s5 + $0x124] sm:$0xf]
    %v1079 = vld [vmem:[%s5 + $0x128] sm:$0xf]
    %v1080 = vld [vmem:[%s5 + $0x12c] sm:$0xf]
    %v1081 = vld [vmem:[%s5 + $0x130] sm:$0xf]
    %v1082 = vld [vmem:[%s5 + $0x134] sm:$0xf]
    %v1083 = vld [vmem:[%s5 + $0x138] sm:$0xf]
    %v1084 = vld [vmem:[%s5 + $0x13c] sm:$0xf]
    %v1085 = vld [vmem:[%s5 + $0x140] sm:$0xf]
    %v1086 = vld [vmem:[%s5 + $0x144] sm:$0xf]
    %v1087 = vld [vmem:[%s5 + $0x148] sm:$0xf]
    %v1088 = vld [vmem:[%s5 + $0x14c] sm:$0xf]
    %v1089 = vld [vmem:[%s5 + $0x150] sm:$0xf]
    %v1090 = vld [vmem:[%s5 + $0x154] sm:$0xf]
    %v1091 = vld [vmem:[%s5 + $0x158] sm:$0xf]
    %v1092 = vld [vmem:[%s5 + $0x15c] sm:$0xf]
    %v1093 = vld [vmem:[%s5 + $0x160] sm:$0xf]
    %v1094 = vld [vmem:[%s5 + $0x164] sm:$0xf]
    %v1095 = vld [vmem:[%s5 + $0x168] sm:$0xf]
    %v1096 = vld [vmem:[%s5 + $0x16c] sm:$0xf]
    %v1097 = vld [vmem:[%s5 + $0x170] sm:$0xf]
    %v1098 = vld [vmem:[%s5 + $0x174] sm:$0xf]
    %v1099 = vld [vmem:[%s5 + $0x178] sm:$0xf]
    %v1100 = vld [vmem:[%s5 + $0x17c] sm:$0xf]
    %v1101 = vld [vmem:[%s5 + $0x180] sm:$0xf]
    %v1102 = vld [vmem:[%s5 + $0x184] sm:$0xf]
    %v1103 = vld [vmem:[%s5 + $0x188] sm:$0xf]
    %v1104 = vld [vmem:[%s5 + $0x18c] sm:$0xf]
    %v1105 = vld [vmem:[%s5 + $0x190] sm:$0xf]
    %v1106 = vld [vmem:[%s5 + $0x194] sm:$0xf]
    %v1107 = vld [vmem:[%s5 + $0x198] sm:$0xf]
    %v1108 = vld [vmem:[%s5 + $0x19c] sm:$0xf]
    %v1109 = vld [vmem:[%s5 + $0x1a0] sm:$0xf]
    %v1110 = vld [vmem:[%s5 + $0x1a4] sm:$0xf]
    %v1111 = vld [vmem:[%s5 + $0x1a8] sm:$0xf]
    %v1112 = vld [vmem:[%s5 + $0x1ac] sm:$0xf]
    %v1113 = vld [vmem:[%s5 + $0x1b0] sm:$0xf]
    %v1114 = vld [vmem:[%s5 + $0x1b4] sm:$0xf]
    %v1115 = vld [vmem:[%s5 + $0x1b8] sm:$0xf]
    %v1116 = vld [vmem:[%s5 + $0x1bc] sm:$0xf]
    %v1117 = vld [vmem:[%s5 + $0x1c0] sm:$0xf]
    %v1118 = vld [vmem:[%s5 + $0x1c4] sm:$0xf]
    %v1119 = vld [vmem:[%s5 + $0x1c8] sm:$0xf]
    %v1120 = vld [vmem:[%s5 + $0x1cc] sm:$0xf]
    %v1121 = vld [vmem:[%s5 + $0x1d0] sm:$0xf]
    %v1122 = vld [vmem:[%s5 + $0x1d4] sm:$0xf]
    %v1123 = vld [vmem:[%s5 + $0x1d8] sm:$0xf]
    %v1124 = vld [vmem:[%s5 + $0x1dc] sm:$0xf]
    %v1125 = vld [vmem:[%s5 + $0x1e0] sm:$0xf]
    %v1126 = vld [vmem:[%s5 + $0x1e4] sm:$0xf]
    %v1127 = vld [vmem:[%s5 + $0x1e8] sm:$0xf]
    %v1128 = vld [vmem:[%s5 + $0x1ec] sm:$0xf]
    %v1129 = vld [vmem:[%s5 + $0x1f0] sm:$0xf]
    %v1130 = vld [vmem:[%s5 + $0x1f4] sm:$0xf]
    %v1131 = vld [vmem:[%s5 + $0x1f8] sm:$0xf]
    %v1132 = vld [vmem:[%s5 + $0x1fc] sm:$0xf]
    %v1135 = vunpack.c.l.b16 %v1001
    %v1136 = vunpack.c.l.b16 %v1003
    %v1137 = vpack.c.b16 %v1135, %v1135
    %v1138 = vpack.c.b16 %v1136, %v1136
    %v1139 = vunpack.c.l.b16 %v1137
    %v1140 = vunpack.c.l.b16 %v1138
    %v1141 = vrot.slane %v1139, 1
    %v1142 = vsel %vm437, %v1140, %v1141
    %v1143 = vpack.c.b16 %v1142, %v1142
    %v1152 = vunpack.c.l.b16 %v1013
    %v1153 = vunpack.c.l.b16 %v1014
    %v1154 = vunpack.c.l.b16 %v1015
    %v1155 = vunpack.c.l.b16 %v1016
    %v1156 = vunpack.c.l.b16 %v1017
    %v1157 = vunpack.c.l.b16 %v1018
    %v1158 = vunpack.c.l.b16 %v1019
    %v1159 = vunpack.c.l.b16 %v1020
    %v1160 = vpack.c.b16 %v1153, %v1152
    %v1161 = vpack.c.b16 %v1155, %v1154
    %v1162 = vpack.c.b16 %v1157, %v1156
    %v1163 = vpack.c.b16 %v1159, %v1158
    %v1169 = vsel %vm408, %v1143, 0
    %1171 = vmatpush.bf16.msra.mxu0 0
    %1172 = vmatpush.bf16.msra.mxu0 0
    %1173 = vmatpush.bf16.msra.mxu0 0
    %1174 = vmatpush.bf16.msra.mxu0 0
    %1175 = vmatpush.bf16.msra.mxu0 %v1163
    %1176 = vmatpush.bf16.msra.mxu0 %v1162
    %1177 = vmatpush.bf16.msra.mxu0 %v1161
    %1178 = vmatpush.bf16.msra.mxu0 %v1160
    %1179 = vmatmul.bf16.gmra.mxu0 %v1169
    %v1180 = vpop.f32.mrf.mxu0
    %v1181 = vadd.f32 0.0, %v1180
    %v1182 = vpop.f32.mrf.mxu0
    %1183 = vdwg.mxu0
    %v1184 = vrot.slane %v1140, 7
    %v1185 = vsel %vm437, %v1184, %v1139
    %v1186 = vpack.c.b16 %v1185, %v1185
    %v1195 = vunpack.c.l.b16 %v1005
    %v1196 = vunpack.c.l.b16 %v1006
    %v1197 = vunpack.c.l.b16 %v1007
    %v1198 = vunpack.c.l.b16 %v1008
    %v1199 = vunpack.c.l.b16 %v1009
    %v1200 = vunpack.c.l.b16 %v1010
    %v1201 = vunpack.c.l.b16 %v1011
    %v1202 = vunpack.c.l.b16 %v1012
    %v1203 = vpack.c.b16 %v1196, %v1195
    %v1204 = vpack.c.b16 %v1198, %v1197
    %v1205 = vpack.c.b16 %v1200, %v1199
    %v1206 = vpack.c.b16 %v1202, %v1201
    %v1212 = vsel %vm408, %v1186, 0
    %1214 = vmatpush.bf16.msra.mxu0 0
    %1215 = vmatpush.bf16.msra.mxu0 0
    %1216 = vmatpush.bf16.msra.mxu0 0
    %1217 = vmatpush.bf16.msra.mxu0 0
    %1218 = vmatpush.bf16.msra.mxu0 %v1206
    %1219 = vmatpush.bf16.msra.mxu0 %v1205
    %1220 = vmatpush.bf16.msra.mxu0 %v1204
    %1221 = vmatpush.bf16.msra.mxu0 %v1203
    %1222 = vmatmul.bf16.gmra.mxu0 %v1212
    %v1223 = vpop.f32.mrf.mxu0
    %v1224 = vadd.f32 %v1181, %v1223
    %v1225 = vpop.f32.mrf.mxu0
    %1226 = vdwg.mxu0
    %v1227 = vrot.slane %v1139, 2
    %v1228 = vrot.slane %v1140, 1
    %v1229 = vsel %vm437, %v1228, %v1227
    %v1230 = vpack.c.b16 %v1229, %v1229
    %v1239 = vunpack.c.l.b16 %v1021
    %v1240 = vunpack.c.l.b16 %v1022
    %v1241 = vunpack.c.l.b16 %v1023
    %v1242 = vunpack.c.l.b16 %v1024
    %v1243 = vunpack.c.l.b16 %v1025
    %v1244 = vunpack.c.l.b16 %v1026
    %v1245 = vunpack.c.l.b16 %v1027
    %v1246 = vunpack.c.l.b16 %v1028
    %v1247 = vpack.c.b16 %v1240, %v1239
    %v1248 = vpack.c.b16 %v1242, %v1241
    %v1249 = vpack.c.b16 %v1244, %v1243
    %v1250 = vpack.c.b16 %v1246, %v1245
    %v1256 = vsel %vm408, %v1230, 0
    %1258 = vmatpush.bf16.msra.mxu0 0
    %1259 = vmatpush.bf16.msra.mxu0 0
    %1260 = vmatpush.bf16.msra.mxu0 0
    %1261 = vmatpush.bf16.msra.mxu0 0
    %1262 = vmatpush.bf16.msra.mxu0 %v1250
    %1263 = vmatpush.bf16.msra.mxu0 %v1249
    %1264 = vmatpush.bf16.msra.mxu0 %v1248
    %1265 = vmatpush.bf16.msra.mxu0 %v1247
    %1266 = vmatmul.bf16.gmra.mxu0 %v1256
    %v1267 = vpop.f32.mrf.mxu0
    %v1268 = vadd.f32 0.0, %v1267
    %v1269 = vpop.f32.mrf.mxu0
    %1270 = vdwg.mxu0
    %v1271 = vadd.f32 %v1224, %v1268
    %v1272 = vrot.slane %v1139, 3
    %v1273 = vrot.slane %v1140, 2
    %v1274 = vsel %vm437, %v1273, %v1272
    %v1275 = vpack.c.b16 %v1274, %v1274
    %v1284 = vunpack.c.l.b16 %v1029
    %v1285 = vunpack.c.l.b16 %v1030
    %v1286 = vunpack.c.l.b16 %v1031
    %v1287 = vunpack.c.l.b16 %v1032
    %v1288 = vunpack.c.l.b16 %v1033
    %v1289 = vunpack.c.l.b16 %v1034
    %v1290 = vunpack.c.l.b16 %v1035
    %v1291 = vunpack.c.l.b16 %v1036
    %v1292 = vpack.c.b16 %v1285, %v1284
    %v1293 = vpack.c.b16 %v1287, %v1286
    %v1294 = vpack.c.b16 %v1289, %v1288
    %v1295 = vpack.c.b16 %v1291, %v1290
    %v1301 = vsel %vm408, %v1275, 0
    %1303 = vmatpush.bf16.msra.mxu0 0
    %1304 = vmatpush.bf16.msra.mxu0 0
    %1305 = vmatpush.bf16.msra.mxu0 0
    %1306 = vmatpush.bf16.msra.mxu0 0
    %1307 = vmatpush.bf16.msra.mxu0 %v1295
    %1308 = vmatpush.bf16.msra.mxu0 %v1294
    %1309 = vmatpush.bf16.msra.mxu0 %v1293
    %1310 = vmatpush.bf16.msra.mxu0 %v1292
    %1311 = vmatmul.bf16.gmra.mxu0 %v1301
    %v1312 = vpop.f32.mrf.mxu0
    %v1313 = vadd.f32 0.0, %v1312
    %v1314 = vpop.f32.mrf.mxu0
    %1315 = vdwg.mxu0
    %v1316 = vadd.f32 %v1271, %v1313
    %v1317 = vrot.slane %v1139, 4
    %v1318 = vrot.slane %v1140, 3
    %v1319 = vsel %vm437, %v1318, %v1317
    %v1320 = vpack.c.b16 %v1319, %v1319
    %v1329 = vunpack.c.l.b16 %v1037
    %v1330 = vunpack.c.l.b16 %v1038
    %v1331 = vunpack.c.l.b16 %v1039
    %v1332 = vunpack.c.l.b16 %v1040
    %v1333 = vunpack.c.l.b16 %v1041
    %v1334 = vunpack.c.l.b16 %v1042
    %v1335 = vunpack.c.l.b16 %v1043
    %v1336 = vunpack.c.l.b16 %v1044
    %v1337 = vpack.c.b16 %v1330, %v1329
    %v1338 = vpack.c.b16 %v1332, %v1331
    %v1339 = vpack.c.b16 %v1334, %v1333
    %v1340 = vpack.c.b16 %v1336, %v1335
    %v1346 = vsel %vm408, %v1320, 0
    %1348 = vmatpush.bf16.msra.mxu0 0
    %1349 = vmatpush.bf16.msra.mxu0 0
    %1350 = vmatpush.bf16.msra.mxu0 0
    %1351 = vmatpush.bf16.msra.mxu0 0
    %1352 = vmatpush.bf16.msra.mxu0 %v1340
    %1353 = vmatpush.bf16.msra.mxu0 %v1339
    %1354 = vmatpush.bf16.msra.mxu0 %v1338
    %1355 = vmatpush.bf16.msra.mxu0 %v1337
    %1356 = vmatmul.bf16.gmra.mxu0 %v1346
    %v1357 = vpop.f32.mrf.mxu0
    %v1358 = vadd.f32 0.0, %v1357
    %v1359 = vpop.f32.mrf.mxu0
    %1360 = vdwg.mxu0
    %v1361 = vadd.f32 %v1316, %v1358
    %v1362 = vrot.slane %v1139, 5
    %v1363 = vrot.slane %v1140, 4
    %v1364 = vsel %vm437, %v1363, %v1362
    %v1365 = vpack.c.b16 %v1364, %v1364
    %v1374 = vunpack.c.l.b16 %v1045
    %v1375 = vunpack.c.l.b16 %v1046
    %v1376 = vunpack.c.l.b16 %v1047
    %v1377 = vunpack.c.l.b16 %v1048
    %v1378 = vunpack.c.l.b16 %v1049
    %v1379 = vunpack.c.l.b16 %v1050
    %v1380 = vunpack.c.l.b16 %v1051
    %v1381 = vunpack.c.l.b16 %v1052
    %v1382 = vpack.c.b16 %v1375, %v1374
    %v1383 = vpack.c.b16 %v1377, %v1376
    %v1384 = vpack.c.b16 %v1379, %v1378
    %v1385 = vpack.c.b16 %v1381, %v1380
    %v1391 = vsel %vm408, %v1365, 0
    %1393 = vmatpush.bf16.msra.mxu0 0
    %1394 = vmatpush.bf16.msra.mxu0 0
    %1395 = vmatpush.bf16.msra.mxu0 0
    %1396 = vmatpush.bf16.msra.mxu0 0
    %1397 = vmatpush.bf16.msra.mxu0 %v1385
    %1398 = vmatpush.bf16.msra.mxu0 %v1384
    %1399 = vmatpush.bf16.msra.mxu0 %v1383
    %1400 = vmatpush.bf16.msra.mxu0 %v1382
    %1401 = vmatmul.bf16.gmra.mxu0 %v1391
    %v1402 = vpop.f32.mrf.mxu0
    %v1403 = vadd.f32 0.0, %v1402
    %v1404 = vpop.f32.mrf.mxu0
    %1405 = vdwg.mxu0
    %v1406 = vadd.f32 %v1361, %v1403
    %v1407 = vrot.slane %v1139, 6
    %v1408 = vrot.slane %v1140, 5
    %v1409 = vsel %vm437, %v1408, %v1407
    %v1410 = vpack.c.b16 %v1409, %v1409
    %v1419 = vunpack.c.l.b16 %v1053
    %v1420 = vunpack.c.l.b16 %v1054
    %v1421 = vunpack.c.l.b16 %v1055
    %v1422 = vunpack.c.l.b16 %v1056
    %v1423 = vunpack.c.l.b16 %v1057
    %v1424 = vunpack.c.l.b16 %v1058
    %v1425 = vunpack.c.l.b16 %v1059
    %v1426 = vunpack.c.l.b16 %v1060
    %v1427 = vpack.c.b16 %v1420, %v1419
    %v1428 = vpack.c.b16 %v1422, %v1421
    %v1429 = vpack.c.b16 %v1424, %v1423
    %v1430 = vpack.c.b16 %v1426, %v1425
    %v1436 = vsel %vm408, %v1410, 0
    %1438 = vmatpush.bf16.msra.mxu0 0
    %1439 = vmatpush.bf16.msra.mxu0 0
    %1440 = vmatpush.bf16.msra.mxu0 0
    %1441 = vmatpush.bf16.msra.mxu0 0
    %1442 = vmatpush.bf16.msra.mxu0 %v1430
    %1443 = vmatpush.bf16.msra.mxu0 %v1429
    %1444 = vmatpush.bf16.msra.mxu0 %v1428
    %1445 = vmatpush.bf16.msra.mxu0 %v1427
    %1446 = vmatmul.bf16.gmra.mxu0 %v1436
    %v1447 = vpop.f32.mrf.mxu0
    %v1448 = vadd.f32 0.0, %v1447
    %v1449 = vpop.f32.mrf.mxu0
    %1450 = vdwg.mxu0
    %v1451 = vadd.f32 %v1406, %v1448
    %v1452 = vrot.slane %v1139, 7
    %v1453 = vrot.slane %v1140, 6
    %v1454 = vsel %vm437, %v1453, %v1452
    %v1455 = vpack.c.b16 %v1454, %v1454
    %v1464 = vunpack.c.l.b16 %v1061
    %v1465 = vunpack.c.l.b16 %v1062
    %v1466 = vunpack.c.l.b16 %v1063
    %v1467 = vunpack.c.l.b16 %v1064
    %v1468 = vunpack.c.l.b16 %v1065
    %v1469 = vunpack.c.l.b16 %v1066
    %v1470 = vunpack.c.l.b16 %v1067
    %v1471 = vunpack.c.l.b16 %v1068
    %v1472 = vpack.c.b16 %v1465, %v1464
    %v1473 = vpack.c.b16 %v1467, %v1466
    %v1474 = vpack.c.b16 %v1469, %v1468
    %v1475 = vpack.c.b16 %v1471, %v1470
    %v1481 = vsel %vm408, %v1455, 0
    %1483 = vmatpush.bf16.msra.mxu0 0
    %1484 = vmatpush.bf16.msra.mxu0 0
    %1485 = vmatpush.bf16.msra.mxu0 0
    %1486 = vmatpush.bf16.msra.mxu0 0
    %1487 = vmatpush.bf16.msra.mxu0 %v1475
    %1488 = vmatpush.bf16.msra.mxu0 %v1474
    %1489 = vmatpush.bf16.msra.mxu0 %v1473
    %1490 = vmatpush.bf16.msra.mxu0 %v1472
    %1491 = vmatmul.bf16.gmra.mxu0 %v1481
    %v1492 = vpop.f32.mrf.mxu0
    %v1493 = vadd.f32 0.0, %v1492
    %v1494 = vpop.f32.mrf.mxu0
    %1495 = vdwg.mxu0
    %v1496 = vadd.f32 %v1451, %v1493
    %v1499 = vunpack.c.l.b16 %v1002
    %v1500 = vunpack.c.l.b16 %v1004
    %v1501 = vpack.c.b16 %v1499, %v1499
    %v1502 = vpack.c.b16 %v1500, %v1500
    %v1503 = vunpack.c.l.b16 %v1501
    %v1504 = vunpack.c.l.b16 %v1502
    %v1505 = vrot.slane %v1504, 7
    %v1506 = vsel %vm437, %v1505, %v1503
    %v1507 = vpack.c.b16 %v1506, %v1506
    %v1516 = vunpack.c.l.b16 %v1069
    %v1517 = vunpack.c.l.b16 %v1070
    %v1518 = vunpack.c.l.b16 %v1071
    %v1519 = vunpack.c.l.b16 %v1072
    %v1520 = vunpack.c.l.b16 %v1073
    %v1521 = vunpack.c.l.b16 %v1074
    %v1522 = vunpack.c.l.b16 %v1075
    %v1523 = vunpack.c.l.b16 %v1076
    %v1524 = vpack.c.b16 %v1517, %v1516
    %v1525 = vpack.c.b16 %v1519, %v1518
    %v1526 = vpack.c.b16 %v1521, %v1520
    %v1527 = vpack.c.b16 %v1523, %v1522
    %v1533 = vsel %vm408, %v1507, 0
    %1535 = vmatpush.bf16.msra.mxu0 0
    %1536 = vmatpush.bf16.msra.mxu0 0
    %1537 = vmatpush.bf16.msra.mxu0 0
    %1538 = vmatpush.bf16.msra.mxu0 0
    %1539 = vmatpush.bf16.msra.mxu0 %v1527
    %1540 = vmatpush.bf16.msra.mxu0 %v1526
    %1541 = vmatpush.bf16.msra.mxu0 %v1525
    %1542 = vmatpush.bf16.msra.mxu0 %v1524
    %1543 = vmatmul.bf16.gmra.mxu0 %v1533
    %v1544 = vpop.f32.mrf.mxu0
    %v1545 = vadd.f32 0.0, %v1544
    %v1546 = vpop.f32.mrf.mxu0
    %1547 = vdwg.mxu0
    %v1548 = vadd.f32 %v1496, %v1545
    %v1549 = vrot.slane %v1503, 1
    %v1550 = vsel %vm437, %v1504, %v1549
    %v1551 = vpack.c.b16 %v1550, %v1550
    %v1560 = vunpack.c.l.b16 %v1077
    %v1561 = vunpack.c.l.b16 %v1078
    %v1562 = vunpack.c.l.b16 %v1079
    %v1563 = vunpack.c.l.b16 %v1080
    %v1564 = vunpack.c.l.b16 %v1081
    %v1565 = vunpack.c.l.b16 %v1082
    %v1566 = vunpack.c.l.b16 %v1083
    %v1567 = vunpack.c.l.b16 %v1084
    %v1568 = vpack.c.b16 %v1561, %v1560
    %v1569 = vpack.c.b16 %v1563, %v1562
    %v1570 = vpack.c.b16 %v1565, %v1564
    %v1571 = vpack.c.b16 %v1567, %v1566
    %v1577 = vsel %vm408, %v1551, 0
    %1579 = vmatpush.bf16.msra.mxu0 0
    %1580 = vmatpush.bf16.msra.mxu0 0
    %1581 = vmatpush.bf16.msra.mxu0 0
    %1582 = vmatpush.bf16.msra.mxu0 0
    %1583 = vmatpush.bf16.msra.mxu0 %v1571
    %1584 = vmatpush.bf16.msra.mxu0 %v1570
    %1585 = vmatpush.bf16.msra.mxu0 %v1569
    %1586 = vmatpush.bf16.msra.mxu0 %v1568
    %1587 = vmatmul.bf16.gmra.mxu0 %v1577
    %v1588 = vpop.f32.mrf.mxu0
    %v1589 = vadd.f32 0.0, %v1588
    %v1590 = vpop.f32.mrf.mxu0
    %1591 = vdwg.mxu0
    %v1592 = vadd.f32 %v1548, %v1589
    %v1593 = vrot.slane %v1503, 2
    %v1594 = vrot.slane %v1504, 1
    %v1595 = vsel %vm437, %v1594, %v1593
    %v1596 = vpack.c.b16 %v1595, %v1595
    %v1605 = vunpack.c.l.b16 %v1085
    %v1606 = vunpack.c.l.b16 %v1086
    %v1607 = vunpack.c.l.b16 %v1087
    %v1608 = vunpack.c.l.b16 %v1088
    %v1609 = vunpack.c.l.b16 %v1089
    %v1610 = vunpack.c.l.b16 %v1090
    %v1611 = vunpack.c.l.b16 %v1091
    %v1612 = vunpack.c.l.b16 %v1092
    %v1613 = vpack.c.b16 %v1606, %v1605
    %v1614 = vpack.c.b16 %v1608, %v1607
    %v1615 = vpack.c.b16 %v1610, %v1609
    %v1616 = vpack.c.b16 %v1612, %v1611
    %v1622 = vsel %vm408, %v1596, 0
    %1624 = vmatpush.bf16.msra.mxu0 0
    %1625 = vmatpush.bf16.msra.mxu0 0
    %1626 = vmatpush.bf16.msra.mxu0 0
    %1627 = vmatpush.bf16.msra.mxu0 0
    %1628 = vmatpush.bf16.msra.mxu0 %v1616
    %1629 = vmatpush.bf16.msra.mxu0 %v1615
    %1630 = vmatpush.bf16.msra.mxu0 %v1614
    %1631 = vmatpush.bf16.msra.mxu0 %v1613
    %1632 = vmatmul.bf16.gmra.mxu0 %v1622
    %v1633 = vpop.f32.mrf.mxu0
    %v1634 = vadd.f32 0.0, %v1633
    %v1635 = vpop.f32.mrf.mxu0
    %1636 = vdwg.mxu0
    %v1637 = vadd.f32 %v1592, %v1634
    %v1638 = vrot.slane %v1503, 3
    %v1639 = vrot.slane %v1504, 2
    %v1640 = vsel %vm437, %v1639, %v1638
    %v1641 = vpack.c.b16 %v1640, %v1640
    %v1650 = vunpack.c.l.b16 %v1093
    %v1651 = vunpack.c.l.b16 %v1094
    %v1652 = vunpack.c.l.b16 %v1095
    %v1653 = vunpack.c.l.b16 %v1096
    %v1654 = vunpack.c.l.b16 %v1097
    %v1655 = vunpack.c.l.b16 %v1098
    %v1656 = vunpack.c.l.b16 %v1099
    %v1657 = vunpack.c.l.b16 %v1100
    %v1658 = vpack.c.b16 %v1651, %v1650
    %v1659 = vpack.c.b16 %v1653, %v1652
    %v1660 = vpack.c.b16 %v1655, %v1654
    %v1661 = vpack.c.b16 %v1657, %v1656
    %v1667 = vsel %vm408, %v1641, 0
    %1669 = vmatpush.bf16.msra.mxu0 0
    %1670 = vmatpush.bf16.msra.mxu0 0
    %1671 = vmatpush.bf16.msra.mxu0 0
    %1672 = vmatpush.bf16.msra.mxu0 0
    %1673 = vmatpush.bf16.msra.mxu0 %v1661
    %1674 = vmatpush.bf16.msra.mxu0 %v1660
    %1675 = vmatpush.bf16.msra.mxu0 %v1659
    %1676 = vmatpush.bf16.msra.mxu0 %v1658
    %1677 = vmatmul.bf16.gmra.mxu0 %v1667
    %v1678 = vpop.f32.mrf.mxu0
    %v1679 = vadd.f32 0.0, %v1678
    %v1680 = vpop.f32.mrf.mxu0
    %1681 = vdwg.mxu0
    %v1682 = vadd.f32 %v1637, %v1679
    %v1683 = vrot.slane %v1503, 4
    %v1684 = vrot.slane %v1504, 3
    %v1685 = vsel %vm437, %v1684, %v1683
    %v1686 = vpack.c.b16 %v1685, %v1685
    %v1695 = vunpack.c.l.b16 %v1101
    %v1696 = vunpack.c.l.b16 %v1102
    %v1697 = vunpack.c.l.b16 %v1103
    %v1698 = vunpack.c.l.b16 %v1104
    %v1699 = vunpack.c.l.b16 %v1105
    %v1700 = vunpack.c.l.b16 %v1106
    %v1701 = vunpack.c.l.b16 %v1107
    %v1702 = vunpack.c.l.b16 %v1108
    %v1703 = vpack.c.b16 %v1696, %v1695
    %v1704 = vpack.c.b16 %v1698, %v1697
    %v1705 = vpack.c.b16 %v1700, %v1699
    %v1706 = vpack.c.b16 %v1702, %v1701
    %v1712 = vsel %vm408, %v1686, 0
    %1714 = vmatpush.bf16.msra.mxu0 0
    %1715 = vmatpush.bf16.msra.mxu0 0
    %1716 = vmatpush.bf16.msra.mxu0 0
    %1717 = vmatpush.bf16.msra.mxu0 0
    %1718 = vmatpush.bf16.msra.mxu0 %v1706
    %1719 = vmatpush.bf16.msra.mxu0 %v1705
    %1720 = vmatpush.bf16.msra.mxu0 %v1704
    %1721 = vmatpush.bf16.msra.mxu0 %v1703
    %1722 = vmatmul.bf16.gmra.mxu0 %v1712
    %v1723 = vpop.f32.mrf.mxu0
    %v1724 = vadd.f32 0.0, %v1723
    %v1725 = vpop.f32.mrf.mxu0
    %1726 = vdwg.mxu0
    %v1727 = vadd.f32 %v1682, %v1724
    %v1728 = vrot.slane %v1503, 5
    %v1729 = vrot.slane %v1504, 4
    %v1730 = vsel %vm437, %v1729, %v1728
    %v1731 = vpack.c.b16 %v1730, %v1730
    %v1740 = vunpack.c.l.b16 %v1109
    %v1741 = vunpack.c.l.b16 %v1110
    %v1742 = vunpack.c.l.b16 %v1111
    %v1743 = vunpack.c.l.b16 %v1112
    %v1744 = vunpack.c.l.b16 %v1113
    %v1745 = vunpack.c.l.b16 %v1114
    %v1746 = vunpack.c.l.b16 %v1115
    %v1747 = vunpack.c.l.b16 %v1116
    %v1748 = vpack.c.b16 %v1741, %v1740
    %v1749 = vpack.c.b16 %v1743, %v1742
    %v1750 = vpack.c.b16 %v1745, %v1744
    %v1751 = vpack.c.b16 %v1747, %v1746
    %v1757 = vsel %vm408, %v1731, 0
    %1759 = vmatpush.bf16.msra.mxu0 0
    %1760 = vmatpush.bf16.msra.mxu0 0
    %1761 = vmatpush.bf16.msra.mxu0 0
    %1762 = vmatpush.bf16.msra.mxu0 0
    %1763 = vmatpush.bf16.msra.mxu0 %v1751
    %1764 = vmatpush.bf16.msra.mxu0 %v1750
    %1765 = vmatpush.bf16.msra.mxu0 %v1749
    %1766 = vmatpush.bf16.msra.mxu0 %v1748
    %1767 = vmatmul.bf16.gmra.mxu0 %v1757
    %v1768 = vpop.f32.mrf.mxu0
    %v1769 = vadd.f32 0.0, %v1768
    %v1770 = vpop.f32.mrf.mxu0
    %1771 = vdwg.mxu0
    %v1772 = vadd.f32 %v1727, %v1769
    %v1773 = vrot.slane %v1503, 6
    %v1774 = vrot.slane %v1504, 5
    %v1775 = vsel %vm437, %v1774, %v1773
    %v1776 = vpack.c.b16 %v1775, %v1775
    %v1785 = vunpack.c.l.b16 %v1117
    %v1786 = vunpack.c.l.b16 %v1118
    %v1787 = vunpack.c.l.b16 %v1119
    %v1788 = vunpack.c.l.b16 %v1120
    %v1789 = vunpack.c.l.b16 %v1121
    %v1790 = vunpack.c.l.b16 %v1122
    %v1791 = vunpack.c.l.b16 %v1123
    %v1792 = vunpack.c.l.b16 %v1124
    %v1793 = vpack.c.b16 %v1786, %v1785
    %v1794 = vpack.c.b16 %v1788, %v1787
    %v1795 = vpack.c.b16 %v1790, %v1789
    %v1796 = vpack.c.b16 %v1792, %v1791
    %v1802 = vsel %vm408, %v1776, 0
    %1804 = vmatpush.bf16.msra.mxu0 0
    %1805 = vmatpush.bf16.msra.mxu0 0
    %1806 = vmatpush.bf16.msra.mxu0 0
    %1807 = vmatpush.bf16.msra.mxu0 0
    %1808 = vmatpush.bf16.msra.mxu0 %v1796
    %1809 = vmatpush.bf16.msra.mxu0 %v1795
    %1810 = vmatpush.bf16.msra.mxu0 %v1794
    %1811 = vmatpush.bf16.msra.mxu0 %v1793
    %1812 = vmatmul.bf16.gmra.mxu0 %v1802
    %v1813 = vpop.f32.mrf.mxu0
    %v1814 = vadd.f32 0.0, %v1813
    %v1815 = vpop.f32.mrf.mxu0
    %1816 = vdwg.mxu0
    %v1817 = vadd.f32 %v1772, %v1814
    %v1818 = vrot.slane %v1503, 7
    %v1819 = vrot.slane %v1504, 6
    %v1820 = vsel %vm437, %v1819, %v1818
    %v1821 = vpack.c.b16 %v1820, %v1820
    %v1830 = vunpack.c.l.b16 %v1125
    %v1831 = vunpack.c.l.b16 %v1126
    %v1832 = vunpack.c.l.b16 %v1127
    %v1833 = vunpack.c.l.b16 %v1128
    %v1834 = vunpack.c.l.b16 %v1129
    %v1835 = vunpack.c.l.b16 %v1130
    %v1836 = vunpack.c.l.b16 %v1131
    %v1837 = vunpack.c.l.b16 %v1132
    %v1838 = vpack.c.b16 %v1831, %v1830
    %v1839 = vpack.c.b16 %v1833, %v1832
    %v1840 = vpack.c.b16 %v1835, %v1834
    %v1841 = vpack.c.b16 %v1837, %v1836
    %v1847 = vsel %vm408, %v1821, 0
    %1849 = vmatpush.bf16.msra.mxu0 0
    %1850 = vmatpush.bf16.msra.mxu0 0
    %1851 = vmatpush.bf16.msra.mxu0 0
    %1852 = vmatpush.bf16.msra.mxu0 0
    %1853 = vmatpush.bf16.msra.mxu0 %v1841
    %1854 = vmatpush.bf16.msra.mxu0 %v1840
    %1855 = vmatpush.bf16.msra.mxu0 %v1839
    %1856 = vmatpush.bf16.msra.mxu0 %v1838
    %1857 = vmatmul.bf16.gmra.mxu0 %v1847
    %v1858 = vpop.f32.mrf.mxu0
    %v1859 = vadd.f32 0.0, %v1858
    %v1860 = vpop.f32.mrf.mxu0
    %1861 = vdwg.mxu0
    %v1862 = vadd.f32 %v1817, %v1859
    %v1863 = vtanh.pop %v1862
    %vm1864 = vcmask 254976
    %1865 = vst.msk [vmem:[#allocation4] sm:$0x3] %vm1864, %v1863
    // Predicated region
    $region26: #{base_encoder_forward.3} parent=1 // pred_check
      _
    $region27: #{base_encoder_forward.3} parent=1 // pred_check_branch
      %1867 = sbr.rel (0) target = $region29
    $region28: #{base_encoder_forward.3} parent=1 // pred_region
      %1869 = vsyncadd [#allocation3], 0
      %s1870 = sshll.u32 [#allocation2], 4
      %s1871 = int_to_ptr.vmem [resolvable:$true] %s1870
      %s1872 = sshll.u32 %s6, 4
      %s1873 = int_to_ptr.hbm [resolvable:$true] %s1872
      %1878 = dma.vmem_to_hbm [thread:$0]  %s1871, 512, %s1873, [#allocation3], 128, 128, 8
    $region29: #{base_encoder_forward.3} parent=1 // pred_fallthru
      _
    // Predicated region
    $region30: #{base_encoder_forward.3} parent=1 // pred_check
      _
    $region31: #{base_encoder_forward.3} parent=1 // pred_check_branch
      %1880 = sbr.rel (0) target = $region33
    $region32: #{base_encoder_forward.3} parent=1 // pred_region
      %1882 = vsyncadd [#allocation5], 0
      %s1884 = sshll.u32 [#allocation4], 4
      %s1885 = int_to_ptr.vmem [resolvable:$true] %s1884
      %s1886 = sshll.u32 %s7, 4
      %s1887 = int_to_ptr.hbm [resolvable:$true] %s1886
      %1889 = dma.vmem_to_hbm [thread:$0]  %s1885, 32, %s1887, [#allocation5]
    $region33: #{base_encoder_forward.3} parent=1 // pred_fallthru
      _
    // Predicated region
    $region34: #{base_encoder_forward.3} parent=1 // pred_check
      _
    $region35: #{base_encoder_forward.3} parent=1 // pred_check_branch
      %1891 = sbr.rel (0) target = $region37
    $region36: #{base_encoder_forward.3} parent=1 // pred_region
      %1893 = dma.done [#allocation3], 512
    $region37: #{base_encoder_forward.3} parent=1 // pred_fallthru
      _
    // Predicated region
    $region38: #{base_encoder_forward.3} parent=1 // pred_check
      _
    $region39: #{base_encoder_forward.3} parent=1 // pred_check_branch
      %1895 = sbr.rel (0) target = $region41
    $region40: #{base_encoder_forward.3} parent=1 // pred_region
      %1897 = dma.done [#allocation5], 32
    $region41: #{base_encoder_forward.3} parent=1 // pred_fallthru
      _
    %1898 = vsyncpa [#allocation3], 1
    %1899 = vsyncpa [#allocation5], 1

</llo_original>
